<compile_context>
chip_gen: v7x
topology: tpu7x:2x2x1
jax: 0.10.0
libtpu: 0.0.40
codegen_flags: <defaults>
</compile_context>

<pallas_src>
import numpy as np

import jax
import jax.numpy as jnp
from jax import lax
from jax.experimental import pallas as pl
from jax.experimental.pallas import tpu as pltpu


# ------------------------- fused Pallas kernel -------------------------

def _cnn_kernel(x_ref, t1_ref, b1_ref, t2_ref, b2_ref,
                w1k_ref, bf1_ref, w2_ref, bf2_ref, w3_ref, bf3_ref, o_ref):
    f32 = jnp.float32
    bf16 = jnp.bfloat16

    # Input image: rows deinterleaved mod 4 (row j holds original H row
    # 4*(j % 8) + j // 8), lanes = w*3 + cin.
    x1 = x_ref[0]                                            # (32, 96) bf16

    # ---- conv1 (5x5, 3->6) + bias + relu, fused with 2x2 maxpool ----
    # acc[b][a, pw*84 + jw*6 + cout] = conv1 output at (oh=4a+b, ow=2jw+pw, cout)
    acc = [None, None, None, None]
    for kh in range(5):
        y = jnp.dot(x1, t1_ref[kh], preferred_element_type=f32)   # (32, 168)
        for b in range(4):
            q = b + kh                        # needed input row = 4a + q
            s = (q % 4) * 8 + q // 4          # its position in the deinterleave
            piece = y[s:s + 7, :]
            acc[b] = piece if acc[b] is None else acc[b] + piece
    m_ev = jnp.maximum(acc[0], acc[1])        # pool over oh: rows i = 0,2,...,12
    m_od = jnp.maximum(acc[2], acc[3])        # pool over oh: rows i = 1,3,...,13
    m_ev = jnp.maximum(m_ev[:, :84], m_ev[:, 84:])     # pool over ow -> (7, 84)
    m_od = jnp.maximum(m_od[:, :84], m_od[:, 84:])
    h1_0 = jnp.maximum(m_ev + b1_ref[...], 0.0).astype(bf16)   # rows i even
    h1_1 = jnp.maximum(m_od + b1_ref[...], 0.0).astype(bf16)   # rows i odd
    # h1_{p}[r, w*6 + c] = pooled conv1 activation at (h = 2r+p, w, c)

    # ---- conv2 (5x5, 6->16) + bias + relu, fused with 2x2 maxpool ----
    acc2 = [None, None]
    for kh in range(5):
        ys = (jnp.dot(h1_0, t2_ref[kh], preferred_element_type=f32),   # (7, 160)
              jnp.dot(h1_1, t2_ref[kh], preferred_element_type=f32))
        for p in range(2):
            q = p + kh                        # needed input row = 2*i2 + q
            piece = ys[q % 2][q // 2:q // 2 + 5, :]
            acc2[p] = piece if acc2[p] is None else acc2[p] + piece
    m2 = jnp.maximum(acc2[0], acc2[1])                 # pool over oh -> (5, 160)
    m2 = jnp.maximum(m2[:, :80], m2[:, 80:])           # pool over ow -> (5, 80)
    h2 = jnp.maximum(m2 + b2_ref[...], 0.0).astype(bf16)
    # h2[h, w*16 + c] = pooled conv2 activation at (h, w, c)

    # ---- fc1 -> relu -> fc2 -> relu -> fc3 ----
    z = bf1_ref[...]                                    # (1, 120) f32
    for h in range(5):
        z = z + jnp.dot(h2[h:h + 1, :], w1k_ref[h], preferred_element_type=f32)
    z = jnp.maximum(z, 0.0).astype(bf16)
    z = jnp.dot(z, w2_ref[...], preferred_element_type=f32) + bf2_ref[...]
    z = jnp.maximum(z, 0.0).astype(bf16)
    z = jnp.dot(z, w3_ref[...], preferred_element_type=f32) + bf3_ref[...]
    o_ref[0] = z                                        # (1, 11) f32


# ------------------------- wrapper -------------------------

def cnn_forward(x_nchw, kp):
    """x_nchw: (B, 3, 32, 32) float32 -> (B, 11) float32 logits."""
    bsz = x_nchw.shape[0]
    # NHWC, rows deinterleaved mod 4, lanes = w*3 + c, bf16 matmul operands.
    x = jnp.transpose(x_nchw, (0, 2, 3, 1))                     # (B, 32, 32, 3)
    x = x.reshape(bsz, 8, 4, 32, 3).transpose(0, 2, 1, 3, 4)    # (B, 4, 8, 32, 3)
    x = x.reshape(bsz, 32, 96).astype(jnp.bfloat16)

    out = pl.pallas_call(
        _cnn_kernel,
        out_shape=jax.ShapeDtypeStruct((bsz, 1, 11), jnp.float32),
        grid=(bsz,),
        in_specs=[
            pl.BlockSpec((1, 32, 96), lambda b: (b, 0, 0)),      # image tile
            pl.BlockSpec((5, 96, 168), lambda b: (0, 0, 0)),     # conv1 Toeplitz
            pl.BlockSpec((1, 84), lambda b: (0, 0)),             # conv1 bias (tiled)
            pl.BlockSpec((5, 84, 160), lambda b: (0, 0, 0)),     # conv2 Toeplitz
            pl.BlockSpec((1, 80), lambda b: (0, 0)),             # conv2 bias (tiled)
            pl.BlockSpec((5, 80, 120), lambda b: (0, 0, 0)),     # fc1 (regrouped)
            pl.BlockSpec((1, 120), lambda b: (0, 0)),            # fc1 bias
            pl.BlockSpec((120, 84), lambda b: (0, 0)),           # fc2
            pl.BlockSpec((1, 84), lambda b: (0, 0)),             # fc2 bias
            pl.BlockSpec((84, 11), lambda b: (0, 0)),            # fc3
            pl.BlockSpec((1, 11), lambda b: (0, 0)),             # fc3 bias
        ],
        out_specs=pl.BlockSpec((1, 1, 11), lambda b: (b, 0, 0)),
        compiler_params=pltpu.CompilerParams(
            dimension_semantics=("parallel",)),
    )(x, kp["t1"], kp["b1"], kp["t2"], kp["b2"],
      kp["w1k"], kp["bf1"], kp["w2"], kp["bf2"], kp["w3"], kp["bf3"])
    return out[:, 0, :]


# ------------------------- one-time weight preparation -------------------------

def prepare_kernel_params(params):
    """Build banded conv matrices / permuted fc weights once (host side)."""
    w1 = np.asarray(params["conv1_w"], np.float32)   # (6, 3, 5, 5)
    b1 = np.asarray(params["conv1_b"], np.float32)
    w2 = np.asarray(params["conv2_w"], np.float32)   # (16, 6, 5, 5)
    b2 = np.asarray(params["conv2_b"], np.float32)
    f1w = np.asarray(params["fc1_w"], np.float32)    # (120, 400)
    f2w = np.asarray(params["fc2_w"], np.float32)    # (84, 120)
    f3w = np.asarray(params["fc3_w"], np.float32)    # (11, 84)

    # conv1: rows = w*3 + cin (w=0..31), cols = pw*84 + jw*6 + cout (ow = 2jw+pw)
    t1 = np.zeros((5, 32 * 3, 2 * 14 * 6), np.float32)
    for kh in range(5):
        for ow in range(28):
            jw, pw = ow // 2, ow % 2
            base = pw * 84 + jw * 6
            for kw in range(5):
                w = ow + kw
                t1[kh, w * 3:(w + 1) * 3, base:base + 6] = w1[:, :, kh, kw].T

    # conv2: rows = w*6 + cin (w=0..13), cols = pw*80 + jw*16 + cout (ow = 2jw+pw)
    t2 = np.zeros((5, 14 * 6, 2 * 5 * 16), np.float32)
    for kh in range(5):
        for ow in range(10):
            jw, pw = ow // 2, ow % 2
            base = pw * 80 + jw * 16
            for kw in range(5):
                w = ow + kw
                t2[kh, w * 6:(w + 1) * 6, base:base + 16] = w2[:, :, kh, kw].T

    # fc1 regrouped to match the kernel's (h, w*16 + c) activation layout,
    # equivalent to torch.flatten's NCHW order (c*25 + h*5 + w).
    w1k = np.zeros((5, 80, 120), np.float32)
    for h in range(5):
        for wd in range(5):
            for c in range(16):
                w1k[h, wd * 16 + c, :] = f1w[:, c * 25 + h * 5 + wd]

    return {
        "t1": jnp.asarray(t1, jnp.bfloat16),
        "b1": jnp.asarray(np.tile(b1, 14)[None, :], dtype=jnp.float32),
        "t2": jnp.asarray(t2, jnp.bfloat16),
        "b2": jnp.asarray(np.tile(b2, 5)[None, :], dtype=jnp.float32),
        "w1k": jnp.asarray(w1k, jnp.bfloat16),
        "bf1": jnp.asarray(np.asarray(params["fc1_b"], np.float32)[None, :]),
        "w2": jnp.asarray(f2w.T, jnp.bfloat16),
        "bf2": jnp.asarray(np.asarray(params["fc2_b"], np.float32)[None, :]),
        "w3": jnp.asarray(f3w.T, jnp.bfloat16),
        "bf3": jnp.asarray(np.asarray(params["fc3_b"], np.float32)[None, :]),
    }


# ------------------------- params / reference -------------------------

def init_params(key):
    # Deterministic synthetic init (PyTorch-like uniform(-1/sqrt(fan_in), ...)).
    ks = jax.random.split(key, 10)

    def u(k, shape, fan_in):
        bound = 1.0 / jnp.sqrt(jnp.float32(fan_in))
        return jax.random.uniform(k, shape, jnp.float32, -bound, bound)

    return {
        "conv1_w": u(ks[0], (6, 3, 5, 5), 3 * 25),
        "conv1_b": u(ks[1], (6,), 3 * 25),
        "conv2_w": u(ks[2], (16, 6, 5, 5), 6 * 25),
        "conv2_b": u(ks[3], (16,), 6 * 25),
        "fc1_w": u(ks[4], (120, 400), 400),
        "fc1_b": u(ks[5], (120,), 400),
        "fc2_w": u(ks[6], (84, 120), 120),
        "fc2_b": u(ks[7], (84,), 120),
        "fc3_w": u(ks[8], (11, 84), 84),
        "fc3_b": u(ks[9], (84,), 84) if False else u(ks[9], (11,), 84),
    }


def cnn_reference(x, params):
    """Pure-XLA reference with PyTorch semantics (NCHW, f32)."""
    def pool2(v):
        b, c, h, w = v.shape
        return v.reshape(b, c, h // 2, 2, w // 2, 2).max(axis=(3, 5))

    dn = ("NCHW", "OIHW", "NCHW")
    y = lax.conv_general_dilated(x, params["conv1_w"], (1, 1), "VALID",
                                 dimension_numbers=dn)
    y = pool2(jnp.maximum(y + params["conv1_b"][None, :, None, None], 0.0))
    y = lax.conv_general_dilated(y, params["conv2_w"], (1, 1), "VALID",
                                 dimension_numbers=dn)
    y = pool2(jnp.maximum(y + params["conv2_b"][None, :, None, None], 0.0))
    flat = y.reshape(y.shape[0], -1)                     # torch.flatten(x, 1)
    z = jnp.maximum(flat @ params["fc1_w"].T + params["fc1_b"], 0.0)
    z = jnp.maximum(z @ params["fc2_w"].T + params["fc2_b"], 0.0)
    return z @ params["fc3_w"].T + params["fc3_b"]


if __name__ == "__main__":
    key = jax.random.PRNGKey(0)
    pkey, xkey = jax.random.split(key)
    params = init_params(pkey)
    kparams = prepare_kernel_params(params)     # one-time layout work

    # The forward pass implies 3x32x32 inputs (two conv(5)+pool stages -> 16*5*5).
    x = jax.random.normal(xkey, (2, 3, 32, 32), jnp.float32)

    out = jax.jit(cnn_forward)(x, kparams)
    out = jax.block_until_ready(out)
    assert out.shape == (2, 11)
    assert bool(jnp.all(jnp.isfinite(out)))

    # Validate against a pure-XLA f32 reference (bf16 operands -> loose tol).
    ref = jax.jit(cnn_reference)(x, params)
    assert bool(jnp.allclose(out, ref, rtol=5e-2, atol=3e-2)), \
        float(jnp.max(jnp.abs(out - ref)))

    print("KERNEL_OK")
</pallas_src>

<mosaic_0001>
module attributes {stable_mosaic.version = 11 : i64} {
  func.func @_cnn_kernel(%arg0: i32, %arg1: memref<1x32x96xbf16, #tpu.memory_space<vmem>>, %arg2: memref<5x96x168xbf16, #tpu.memory_space<vmem>>, %arg3: memref<1x84xf32, #tpu.memory_space<vmem>>, %arg4: memref<5x84x160xbf16, #tpu.memory_space<vmem>>, %arg5: memref<1x80xf32, #tpu.memory_space<vmem>>, %arg6: memref<5x80x120xbf16, #tpu.memory_space<vmem>>, %arg7: memref<1x120xf32, #tpu.memory_space<vmem>>, %arg8: memref<120x84xbf16, #tpu.memory_space<vmem>>, %arg9: memref<1x84xf32, #tpu.memory_space<vmem>>, %arg10: memref<84x11xbf16, #tpu.memory_space<vmem>>, %arg11: memref<1x11xf32, #tpu.memory_space<vmem>>, %arg12: memref<1x1x11xf32, #tpu.memory_space<vmem>>) attributes {dimension_semantics = [#tpu.dimension_semantics<parallel>], iteration_bounds = array<i64: 2>, scalar_prefetch = 0 : i64, scratch_operands = 0 : i64, tpu.core_type = #tpu.core_type<tc>, window_params = [{transform_indices = @transform_0, window_bounds = array<i64: 1, 32, 96>}, {pipeline_mode = #tpu.pipeline_mode<synchronous>, transform_indices = @transform_1, window_bounds = array<i64: 5, 96, 168>}, {pipeline_mode = #tpu.pipeline_mode<synchronous>, transform_indices = @transform_2, window_bounds = array<i64: 1, 84>}, {pipeline_mode = #tpu.pipeline_mode<synchronous>, transform_indices = @transform_3, window_bounds = array<i64: 5, 84, 160>}, {pipeline_mode = #tpu.pipeline_mode<synchronous>, transform_indices = @transform_4, window_bounds = array<i64: 1, 80>}, {pipeline_mode = #tpu.pipeline_mode<synchronous>, transform_indices = @transform_5, window_bounds = array<i64: 5, 80, 120>}, {pipeline_mode = #tpu.pipeline_mode<synchronous>, transform_indices = @transform_6, window_bounds = array<i64: 1, 120>}, {pipeline_mode = #tpu.pipeline_mode<synchronous>, transform_indices = @transform_7, window_bounds = array<i64: 120, 84>}, {pipeline_mode = #tpu.pipeline_mode<synchronous>, transform_indices = @transform_8, window_bounds = array<i64: 1, 84>}, {pipeline_mode = #tpu.pipeline_mode<synchronous>, transform_indices = @transform_9, window_bounds = array<i64: 84, 11>}, {pipeline_mode = #tpu.pipeline_mode<synchronous>, transform_indices = @transform_10, window_bounds = array<i64: 1, 11>}, {transform_indices = @transform_11, window_bounds = array<i64: 1, 1, 11>}]} {
    %c0 = arith.constant 0 : index
    %c0_0 = arith.constant 0 : index
    %c0_1 = arith.constant 0 : index
    %0 = vector.load %arg1[%c0, %c0_0, %c0_1] : memref<1x32x96xbf16, #tpu.memory_space<vmem>>, vector<1x32x96xbf16>
    %1 = vector.shape_cast %0 : vector<1x32x96xbf16> to vector<32x96xbf16>
    %c0_2 = arith.constant 0 : index
    %c0_3 = arith.constant 0 : index
    %c0_4 = arith.constant 0 : index
    %2 = vector.load %arg2[%c0_2, %c0_3, %c0_4] : memref<5x96x168xbf16, #tpu.memory_space<vmem>>, vector<1x96x168xbf16>
    %3 = vector.shape_cast %2 : vector<1x96x168xbf16> to vector<96x168xbf16>
    %cst = arith.constant dense<0.000000e+00> : vector<32x168xf32>
    %4 = tpu.matmul %1, %3, %cst {dimension_numbers = #tpu.dot_dimension_numbers<[1], [0], [0], [1], [0, 0, 1, 1], [], []>} : vector<32x96xbf16>, vector<96x168xbf16>, vector<32x168xf32> -> vector<32x168xf32>
    %5 = vector.extract_strided_slice %4 {offsets = [0, 0], sizes = [7, 168], strides = [1, 1]} : vector<32x168xf32> to vector<7x168xf32>
    %6 = vector.extract_strided_slice %4 {offsets = [8, 0], sizes = [7, 168], strides = [1, 1]} : vector<32x168xf32> to vector<7x168xf32>
    %7 = vector.extract_strided_slice %4 {offsets = [16, 0], sizes = [7, 168], strides = [1, 1]} : vector<32x168xf32> to vector<7x168xf32>
    %8 = vector.extract_strided_slice %4 {offsets = [24, 0], sizes = [7, 168], strides = [1, 1]} : vector<32x168xf32> to vector<7x168xf32>
    %c1 = arith.constant 1 : index
    %c0_5 = arith.constant 0 : index
    %c0_6 = arith.constant 0 : index
    %9 = vector.load %arg2[%c1, %c0_5, %c0_6] : memref<5x96x168xbf16, #tpu.memory_space<vmem>>, vector<1x96x168xbf16>
    %10 = vector.shape_cast %9 : vector<1x96x168xbf16> to vector<96x168xbf16>
    %cst_7 = arith.constant dense<0.000000e+00> : vector<32x168xf32>
    %11 = tpu.matmul %1, %10, %cst_7 {dimension_numbers = #tpu.dot_dimension_numbers<[1], [0], [0], [1], [0, 0, 1, 1], [], []>} : vector<32x96xbf16>, vector<96x168xbf16>, vector<32x168xf32> -> vector<32x168xf32>
    %12 = vector.extract_strided_slice %11 {offsets = [8, 0], sizes = [7, 168], strides = [1, 1]} : vector<32x168xf32> to vector<7x168xf32>
    %13 = arith.addf %5, %12 : vector<7x168xf32>
    %14 = vector.extract_strided_slice %11 {offsets = [16, 0], sizes = [7, 168], strides = [1, 1]} : vector<32x168xf32> to vector<7x168xf32>
    %15 = arith.addf %6, %14 : vector<7x168xf32>
    %16 = vector.extract_strided_slice %11 {offsets = [24, 0], sizes = [7, 168], strides = [1, 1]} : vector<32x168xf32> to vector<7x168xf32>
    %17 = arith.addf %7, %16 : vector<7x168xf32>
    %18 = vector.extract_strided_slice %11 {offsets = [1, 0], sizes = [7, 168], strides = [1, 1]} : vector<32x168xf32> to vector<7x168xf32>
    %19 = arith.addf %8, %18 : vector<7x168xf32>
    %c2 = arith.constant 2 : index
    %c0_8 = arith.constant 0 : index
    %c0_9 = arith.constant 0 : index
    %20 = vector.load %arg2[%c2, %c0_8, %c0_9] : memref<5x96x168xbf16, #tpu.memory_space<vmem>>, vector<1x96x168xbf16>
    %21 = vector.shape_cast %20 : vector<1x96x168xbf16> to vector<96x168xbf16>
    %cst_10 = arith.constant dense<0.000000e+00> : vector<32x168xf32>
    %22 = tpu.matmul %1, %21, %cst_10 {dimension_numbers = #tpu.dot_dimension_numbers<[1], [0], [0], [1], [0, 0, 1, 1], [], []>} : vector<32x96xbf16>, vector<96x168xbf16>, vector<32x168xf32> -> vector<32x168xf32>
    %23 = vector.extract_strided_slice %22 {offsets = [16, 0], sizes = [7, 168], strides = [1, 1]} : vector<32x168xf32> to vector<7x168xf32>
    %24 = arith.addf %13, %23 : vector<7x168xf32>
    %25 = vector.extract_strided_slice %22 {offsets = [24, 0], sizes = [7, 168], strides = [1, 1]} : vector<32x168xf32> to vector<7x168xf32>
    %26 = arith.addf %15, %25 : vector<7x168xf32>
    %27 = vector.extract_strided_slice %22 {offsets = [1, 0], sizes = [7, 168], strides = [1, 1]} : vector<32x168xf32> to vector<7x168xf32>
    %28 = arith.addf %17, %27 : vector<7x168xf32>
    %29 = vector.extract_strided_slice %22 {offsets = [9, 0], sizes = [7, 168], strides = [1, 1]} : vector<32x168xf32> to vector<7x168xf32>
    %30 = arith.addf %19, %29 : vector<7x168xf32>
    %c3 = arith.constant 3 : index
    %c0_11 = arith.constant 0 : index
    %c0_12 = arith.constant 0 : index
    %31 = vector.load %arg2[%c3, %c0_11, %c0_12] : memref<5x96x168xbf16, #tpu.memory_space<vmem>>, vector<1x96x168xbf16>
    %32 = vector.shape_cast %31 : vector<1x96x168xbf16> to vector<96x168xbf16>
    %cst_13 = arith.constant dense<0.000000e+00> : vector<32x168xf32>
    %33 = tpu.matmul %1, %32, %cst_13 {dimension_numbers = #tpu.dot_dimension_numbers<[1], [0], [0], [1], [0, 0, 1, 1], [], []>} : vector<32x96xbf16>, vector<96x168xbf16>, vector<32x168xf32> -> vector<32x168xf32>
    %34 = vector.extract_strided_slice %33 {offsets = [24, 0], sizes = [7, 168], strides = [1, 1]} : vector<32x168xf32> to vector<7x168xf32>
    %35 = arith.addf %24, %34 : vector<7x168xf32>
    %36 = vector.extract_strided_slice %33 {offsets = [1, 0], sizes = [7, 168], strides = [1, 1]} : vector<32x168xf32> to vector<7x168xf32>
    %37 = arith.addf %26, %36 : vector<7x168xf32>
    %38 = vector.extract_strided_slice %33 {offsets = [9, 0], sizes = [7, 168], strides = [1, 1]} : vector<32x168xf32> to vector<7x168xf32>
    %39 = arith.addf %28, %38 : vector<7x168xf32>
    %40 = vector.extract_strided_slice %33 {offsets = [17, 0], sizes = [7, 168], strides = [1, 1]} : vector<32x168xf32> to vector<7x168xf32>
    %41 = arith.addf %30, %40 : vector<7x168xf32>
    %c4 = arith.constant 4 : index
    %c0_14 = arith.constant 0 : index
    %c0_15 = arith.constant 0 : index
    %42 = vector.load %arg2[%c4, %c0_14, %c0_15] : memref<5x96x168xbf16, #tpu.memory_space<vmem>>, vector<1x96x168xbf16>
    %43 = vector.shape_cast %42 : vector<1x96x168xbf16> to vector<96x168xbf16>
    %cst_16 = arith.constant dense<0.000000e+00> : vector<32x168xf32>
    %44 = tpu.matmul %1, %43, %cst_16 {dimension_numbers = #tpu.dot_dimension_numbers<[1], [0], [0], [1], [0, 0, 1, 1], [], []>} : vector<32x96xbf16>, vector<96x168xbf16>, vector<32x168xf32> -> vector<32x168xf32>
    %45 = vector.extract_strided_slice %44 {offsets = [1, 0], sizes = [7, 168], strides = [1, 1]} : vector<32x168xf32> to vector<7x168xf32>
    %46 = arith.addf %35, %45 : vector<7x168xf32>
    %47 = vector.extract_strided_slice %44 {offsets = [9, 0], sizes = [7, 168], strides = [1, 1]} : vector<32x168xf32> to vector<7x168xf32>
    %48 = arith.addf %37, %47 : vector<7x168xf32>
    %49 = vector.extract_strided_slice %44 {offsets = [17, 0], sizes = [7, 168], strides = [1, 1]} : vector<32x168xf32> to vector<7x168xf32>
    %50 = arith.addf %39, %49 : vector<7x168xf32>
    %51 = vector.extract_strided_slice %44 {offsets = [25, 0], sizes = [7, 168], strides = [1, 1]} : vector<32x168xf32> to vector<7x168xf32>
    %52 = arith.addf %41, %51 : vector<7x168xf32>
    %53 = arith.maximumf %46, %48 : vector<7x168xf32>
    %54 = arith.maximumf %50, %52 : vector<7x168xf32>
    %55 = vector.extract_strided_slice %53 {offsets = [0, 0], sizes = [7, 84], strides = [1, 1]} : vector<7x168xf32> to vector<7x84xf32>
    %56 = vector.extract_strided_slice %53 {offsets = [0, 84], sizes = [7, 84], strides = [1, 1]} : vector<7x168xf32> to vector<7x84xf32>
    %57 = arith.maximumf %55, %56 : vector<7x84xf32>
    %58 = vector.extract_strided_slice %54 {offsets = [0, 0], sizes = [7, 84], strides = [1, 1]} : vector<7x168xf32> to vector<7x84xf32>
    %59 = vector.extract_strided_slice %54 {offsets = [0, 84], sizes = [7, 84], strides = [1, 1]} : vector<7x168xf32> to vector<7x84xf32>
    %60 = arith.maximumf %58, %59 : vector<7x84xf32>
    %c0_17 = arith.constant 0 : index
    %c0_18 = arith.constant 0 : index
    %61 = vector.load %arg3[%c0_17, %c0_18] : memref<1x84xf32, #tpu.memory_space<vmem>>, vector<1x84xf32>
    %62 = vector.broadcast %61 : vector<1x84xf32> to vector<7x84xf32>
    %63 = arith.addf %57, %62 : vector<7x84xf32>
    %cst_19 = arith.constant 0.000000e+00 : f32
    %64 = vector.broadcast %cst_19 : f32 to vector<7x84xf32>
    %65 = arith.maximumf %63, %64 : vector<7x84xf32>
    %66 = arith.truncf %65 : vector<7x84xf32> to vector<7x84xbf16>
    %c0_20 = arith.constant 0 : index
    %c0_21 = arith.constant 0 : index
    %67 = vector.load %arg3[%c0_20, %c0_21] : memref<1x84xf32, #tpu.memory_space<vmem>>, vector<1x84xf32>
    %68 = vector.broadcast %67 : vector<1x84xf32> to vector<7x84xf32>
    %69 = arith.addf %60, %68 : vector<7x84xf32>
    %cst_22 = arith.constant 0.000000e+00 : f32
    %70 = vector.broadcast %cst_22 : f32 to vector<7x84xf32>
    %71 = arith.maximumf %69, %70 : vector<7x84xf32>
    %72 = arith.truncf %71 : vector<7x84xf32> to vector<7x84xbf16>
    %c0_23 = arith.constant 0 : index
    %c0_24 = arith.constant 0 : index
    %c0_25 = arith.constant 0 : index
    %73 = vector.load %arg4[%c0_23, %c0_24, %c0_25] : memref<5x84x160xbf16, #tpu.memory_space<vmem>>, vector<1x84x160xbf16>
    %74 = vector.shape_cast %73 : vector<1x84x160xbf16> to vector<84x160xbf16>
    %cst_26 = arith.constant dense<0.000000e+00> : vector<7x160xf32>
    %75 = tpu.matmul %66, %74, %cst_26 {dimension_numbers = #tpu.dot_dimension_numbers<[1], [0], [0], [1], [0, 0, 1, 1], [], []>} : vector<7x84xbf16>, vector<84x160xbf16>, vector<7x160xf32> -> vector<7x160xf32>
    %c0_27 = arith.constant 0 : index
    %c0_28 = arith.constant 0 : index
    %c0_29 = arith.constant 0 : index
    %76 = vector.load %arg4[%c0_27, %c0_28, %c0_29] : memref<5x84x160xbf16, #tpu.memory_space<vmem>>, vector<1x84x160xbf16>
    %77 = vector.shape_cast %76 : vector<1x84x160xbf16> to vector<84x160xbf16>
    %cst_30 = arith.constant dense<0.000000e+00> : vector<7x160xf32>
    %78 = tpu.matmul %72, %77, %cst_30 {dimension_numbers = #tpu.dot_dimension_numbers<[1], [0], [0], [1], [0, 0, 1, 1], [], []>} : vector<7x84xbf16>, vector<84x160xbf16>, vector<7x160xf32> -> vector<7x160xf32>
    %79 = vector.extract_strided_slice %75 {offsets = [0, 0], sizes = [5, 160], strides = [1, 1]} : vector<7x160xf32> to vector<5x160xf32>
    %80 = vector.extract_strided_slice %78 {offsets = [0, 0], sizes = [5, 160], strides = [1, 1]} : vector<7x160xf32> to vector<5x160xf32>
    %c1_31 = arith.constant 1 : index
    %c0_32 = arith.constant 0 : index
    %c0_33 = arith.constant 0 : index
    %81 = vector.load %arg4[%c1_31, %c0_32, %c0_33] : memref<5x84x160xbf16, #tpu.memory_space<vmem>>, vector<1x84x160xbf16>
    %82 = vector.shape_cast %81 : vector<1x84x160xbf16> to vector<84x160xbf16>
    %cst_34 = arith.constant dense<0.000000e+00> : vector<7x160xf32>
    %83 = tpu.matmul %66, %82, %cst_34 {dimension_numbers = #tpu.dot_dimension_numbers<[1], [0], [0], [1], [0, 0, 1, 1], [], []>} : vector<7x84xbf16>, vector<84x160xbf16>, vector<7x160xf32> -> vector<7x160xf32>
    %c1_35 = arith.constant 1 : index
    %c0_36 = arith.constant 0 : index
    %c0_37 = arith.constant 0 : index
    %84 = vector.load %arg4[%c1_35, %c0_36, %c0_37] : memref<5x84x160xbf16, #tpu.memory_space<vmem>>, vector<1x84x160xbf16>
    %85 = vector.shape_cast %84 : vector<1x84x160xbf16> to vector<84x160xbf16>
    %cst_38 = arith.constant dense<0.000000e+00> : vector<7x160xf32>
    %86 = tpu.matmul %72, %85, %cst_38 {dimension_numbers = #tpu.dot_dimension_numbers<[1], [0], [0], [1], [0, 0, 1, 1], [], []>} : vector<7x84xbf16>, vector<84x160xbf16>, vector<7x160xf32> -> vector<7x160xf32>
    %87 = vector.extract_strided_slice %86 {offsets = [0, 0], sizes = [5, 160], strides = [1, 1]} : vector<7x160xf32> to vector<5x160xf32>
    %88 = arith.addf %79, %87 : vector<5x160xf32>
    %89 = vector.extract_strided_slice %83 {offsets = [1, 0], sizes = [5, 160], strides = [1, 1]} : vector<7x160xf32> to vector<5x160xf32>
    %90 = arith.addf %80, %89 : vector<5x160xf32>
    %c2_39 = arith.constant 2 : index
    %c0_40 = arith.constant 0 : index
    %c0_41 = arith.constant 0 : index
    %91 = vector.load %arg4[%c2_39, %c0_40, %c0_41] : memref<5x84x160xbf16, #tpu.memory_space<vmem>>, vector<1x84x160xbf16>
    %92 = vector.shape_cast %91 : vector<1x84x160xbf16> to vector<84x160xbf16>
    %cst_42 = arith.constant dense<0.000000e+00> : vector<7x160xf32>
    %93 = tpu.matmul %66, %92, %cst_42 {dimension_numbers = #tpu.dot_dimension_numbers<[1], [0], [0], [1], [0, 0, 1, 1], [], []>} : vector<7x84xbf16>, vector<84x160xbf16>, vector<7x160xf32> -> vector<7x160xf32>
    %c2_43 = arith.constant 2 : index
    %c0_44 = arith.constant 0 : index
    %c0_45 = arith.constant 0 : index
    %94 = vector.load %arg4[%c2_43, %c0_44, %c0_45] : memref<5x84x160xbf16, #tpu.memory_space<vmem>>, vector<1x84x160xbf16>
    %95 = vector.shape_cast %94 : vector<1x84x160xbf16> to vector<84x160xbf16>
    %cst_46 = arith.constant dense<0.000000e+00> : vector<7x160xf32>
    %96 = tpu.matmul %72, %95, %cst_46 {dimension_numbers = #tpu.dot_dimension_numbers<[1], [0], [0], [1], [0, 0, 1, 1], [], []>} : vector<7x84xbf16>, vector<84x160xbf16>, vector<7x160xf32> -> vector<7x160xf32>
    %97 = vector.extract_strided_slice %93 {offsets = [1, 0], sizes = [5, 160], strides = [1, 1]} : vector<7x160xf32> to vector<5x160xf32>
    %98 = arith.addf %88, %97 : vector<5x160xf32>
    %99 = vector.extract_strided_slice %96 {offsets = [1, 0], sizes = [5, 160], strides = [1, 1]} : vector<7x160xf32> to vector<5x160xf32>
    %100 = arith.addf %90, %99 : vector<5x160xf32>
    %c3_47 = arith.constant 3 : index
    %c0_48 = arith.constant 0 : index
    %c0_49 = arith.constant 0 : index
    %101 = vector.load %arg4[%c3_47, %c0_48, %c0_49] : memref<5x84x160xbf16, #tpu.memory_space<vmem>>, vector<1x84x160xbf16>
    %102 = vector.shape_cast %101 : vector<1x84x160xbf16> to vector<84x160xbf16>
    %cst_50 = arith.constant dense<0.000000e+00> : vector<7x160xf32>
    %103 = tpu.matmul %66, %102, %cst_50 {dimension_numbers = #tpu.dot_dimension_numbers<[1], [0], [0], [1], [0, 0, 1, 1], [], []>} : vector<7x84xbf16>, vector<84x160xbf16>, vector<7x160xf32> -> vector<7x160xf32>
    %c3_51 = arith.constant 3 : index
    %c0_52 = arith.constant 0 : index
    %c0_53 = arith.constant 0 : index
    %104 = vector.load %arg4[%c3_51, %c0_52, %c0_53] : memref<5x84x160xbf16, #tpu.memory_space<vmem>>, vector<1x84x160xbf16>
    %105 = vector.shape_cast %104 : vector<1x84x160xbf16> to vector<84x160xbf16>
    %cst_54 = arith.constant dense<0.000000e+00> : vector<7x160xf32>
    %106 = tpu.matmul %72, %105, %cst_54 {dimension_numbers = #tpu.dot_dimension_numbers<[1], [0], [0], [1], [0, 0, 1, 1], [], []>} : vector<7x84xbf16>, vector<84x160xbf16>, vector<7x160xf32> -> vector<7x160xf32>
    %107 = vector.extract_strided_slice %106 {offsets = [1, 0], sizes = [5, 160], strides = [1, 1]} : vector<7x160xf32> to vector<5x160xf32>
    %108 = arith.addf %98, %107 : vector<5x160xf32>
    %109 = vector.extract_strided_slice %103 {offsets = [2, 0], sizes = [5, 160], strides = [1, 1]} : vector<7x160xf32> to vector<5x160xf32>
    %110 = arith.addf %100, %109 : vector<5x160xf32>
    %c4_55 = arith.constant 4 : index
    %c0_56 = arith.constant 0 : index
    %c0_57 = arith.constant 0 : index
    %111 = vector.load %arg4[%c4_55, %c0_56, %c0_57] : memref<5x84x160xbf16, #tpu.memory_space<vmem>>, vector<1x84x160xbf16>
    %112 = vector.shape_cast %111 : vector<1x84x160xbf16> to vector<84x160xbf16>
    %cst_58 = arith.constant dense<0.000000e+00> : vector<7x160xf32>
    %113 = tpu.matmul %66, %112, %cst_58 {dimension_numbers = #tpu.dot_dimension_numbers<[1], [0], [0], [1], [0, 0, 1, 1], [], []>} : vector<7x84xbf16>, vector<84x160xbf16>, vector<7x160xf32> -> vector<7x160xf32>
    %c4_59 = arith.constant 4 : index
    %c0_60 = arith.constant 0 : index
    %c0_61 = arith.constant 0 : index
    %114 = vector.load %arg4[%c4_59, %c0_60, %c0_61] : memref<5x84x160xbf16, #tpu.memory_space<vmem>>, vector<1x84x160xbf16>
    %115 = vector.shape_cast %114 : vector<1x84x160xbf16> to vector<84x160xbf16>
    %cst_62 = arith.constant dense<0.000000e+00> : vector<7x160xf32>
    %116 = tpu.matmul %72, %115, %cst_62 {dimension_numbers = #tpu.dot_dimension_numbers<[1], [0], [0], [1], [0, 0, 1, 1], [], []>} : vector<7x84xbf16>, vector<84x160xbf16>, vector<7x160xf32> -> vector<7x160xf32>
    %117 = vector.extract_strided_slice %113 {offsets = [2, 0], sizes = [5, 160], strides = [1, 1]} : vector<7x160xf32> to vector<5x160xf32>
    %118 = arith.addf %108, %117 : vector<5x160xf32>
    %119 = vector.extract_strided_slice %116 {offsets = [2, 0], sizes = [5, 160], strides = [1, 1]} : vector<7x160xf32> to vector<5x160xf32>
    %120 = arith.addf %110, %119 : vector<5x160xf32>
    %121 = arith.maximumf %118, %120 : vector<5x160xf32>
    %122 = vector.extract_strided_slice %121 {offsets = [0, 0], sizes = [5, 80], strides = [1, 1]} : vector<5x160xf32> to vector<5x80xf32>
    %123 = vector.extract_strided_slice %121 {offsets = [0, 80], sizes = [5, 80], strides = [1, 1]} : vector<5x160xf32> to vector<5x80xf32>
    %124 = arith.maximumf %122, %123 : vector<5x80xf32>
    %c0_63 = arith.constant 0 : index
    %c0_64 = arith.constant 0 : index
    %125 = vector.load %arg5[%c0_63, %c0_64] : memref<1x80xf32, #tpu.memory_space<vmem>>, vector<1x80xf32>
    %126 = vector.broadcast %125 : vector<1x80xf32> to vector<5x80xf32>
    %127 = arith.addf %124, %126 : vector<5x80xf32>
    %cst_65 = arith.constant 0.000000e+00 : f32
    %128 = vector.broadcast %cst_65 : f32 to vector<5x80xf32>
    %129 = arith.maximumf %127, %128 : vector<5x80xf32>
    %130 = arith.truncf %129 : vector<5x80xf32> to vector<5x80xbf16>
    %c0_66 = arith.constant 0 : index
    %c0_67 = arith.constant 0 : index
    %131 = vector.load %arg7[%c0_66, %c0_67] : memref<1x120xf32, #tpu.memory_space<vmem>>, vector<1x120xf32>
    %132 = vector.extract_strided_slice %130 {offsets = [0, 0], sizes = [1, 80], strides = [1, 1]} : vector<5x80xbf16> to vector<1x80xbf16>
    %c0_68 = arith.constant 0 : index
    %c0_69 = arith.constant 0 : index
    %c0_70 = arith.constant 0 : index
    %133 = vector.load %arg6[%c0_68, %c0_69, %c0_70] : memref<5x80x120xbf16, #tpu.memory_space<vmem>>, vector<1x80x120xbf16>
    %134 = vector.shape_cast %133 : vector<1x80x120xbf16> to vector<80x120xbf16>
    %cst_71 = arith.constant dense<0.000000e+00> : vector<1x120xf32>
    %135 = tpu.matmul %132, %134, %cst_71 {dimension_numbers = #tpu.dot_dimension_numbers<[1], [0], [0], [1], [0, 0, 1, 1], [], []>} : vector<1x80xbf16>, vector<80x120xbf16>, vector<1x120xf32> -> vector<1x120xf32>
    %136 = arith.addf %131, %135 : vector<1x120xf32>
    %137 = vector.extract_strided_slice %130 {offsets = [1, 0], sizes = [1, 80], strides = [1, 1]} : vector<5x80xbf16> to vector<1x80xbf16>
    %c1_72 = arith.constant 1 : index
    %c0_73 = arith.constant 0 : index
    %c0_74 = arith.constant 0 : index
    %138 = vector.load %arg6[%c1_72, %c0_73, %c0_74] : memref<5x80x120xbf16, #tpu.memory_space<vmem>>, vector<1x80x120xbf16>
    %139 = vector.shape_cast %138 : vector<1x80x120xbf16> to vector<80x120xbf16>
    %cst_75 = arith.constant dense<0.000000e+00> : vector<1x120xf32>
    %140 = tpu.matmul %137, %139, %cst_75 {dimension_numbers = #tpu.dot_dimension_numbers<[1], [0], [0], [1], [0, 0, 1, 1], [], []>} : vector<1x80xbf16>, vector<80x120xbf16>, vector<1x120xf32> -> vector<1x120xf32>
    %141 = arith.addf %136, %140 : vector<1x120xf32>
    %142 = vector.extract_strided_slice %130 {offsets = [2, 0], sizes = [1, 80], strides = [1, 1]} : vector<5x80xbf16> to vector<1x80xbf16>
    %c2_76 = arith.constant 2 : index
    %c0_77 = arith.constant 0 : index
    %c0_78 = arith.constant 0 : index
    %143 = vector.load %arg6[%c2_76, %c0_77, %c0_78] : memref<5x80x120xbf16, #tpu.memory_space<vmem>>, vector<1x80x120xbf16>
    %144 = vector.shape_cast %143 : vector<1x80x120xbf16> to vector<80x120xbf16>
    %cst_79 = arith.constant dense<0.000000e+00> : vector<1x120xf32>
    %145 = tpu.matmul %142, %144, %cst_79 {dimension_numbers = #tpu.dot_dimension_numbers<[1], [0], [0], [1], [0, 0, 1, 1], [], []>} : vector<1x80xbf16>, vector<80x120xbf16>, vector<1x120xf32> -> vector<1x120xf32>
    %146 = arith.addf %141, %145 : vector<1x120xf32>
    %147 = vector.extract_strided_slice %130 {offsets = [3, 0], sizes = [1, 80], strides = [1, 1]} : vector<5x80xbf16> to vector<1x80xbf16>
    %c3_80 = arith.constant 3 : index
    %c0_81 = arith.constant 0 : index
    %c0_82 = arith.constant 0 : index
    %148 = vector.load %arg6[%c3_80, %c0_81, %c0_82] : memref<5x80x120xbf16, #tpu.memory_space<vmem>>, vector<1x80x120xbf16>
    %149 = vector.shape_cast %148 : vector<1x80x120xbf16> to vector<80x120xbf16>
    %cst_83 = arith.constant dense<0.000000e+00> : vector<1x120xf32>
    %150 = tpu.matmul %147, %149, %cst_83 {dimension_numbers = #tpu.dot_dimension_numbers<[1], [0], [0], [1], [0, 0, 1, 1], [], []>} : vector<1x80xbf16>, vector<80x120xbf16>, vector<1x120xf32> -> vector<1x120xf32>
    %151 = arith.addf %146, %150 : vector<1x120xf32>
    %152 = vector.extract_strided_slice %130 {offsets = [4, 0], sizes = [1, 80], strides = [1, 1]} : vector<5x80xbf16> to vector<1x80xbf16>
    %c4_84 = arith.constant 4 : index
    %c0_85 = arith.constant 0 : index
    %c0_86 = arith.constant 0 : index
    %153 = vector.load %arg6[%c4_84, %c0_85, %c0_86] : memref<5x80x120xbf16, #tpu.memory_space<vmem>>, vector<1x80x120xbf16>
    %154 = vector.shape_cast %153 : vector<1x80x120xbf16> to vector<80x120xbf16>
    %cst_87 = arith.constant dense<0.000000e+00> : vector<1x120xf32>
    %155 = tpu.matmul %152, %154, %cst_87 {dimension_numbers = #tpu.dot_dimension_numbers<[1], [0], [0], [1], [0, 0, 1, 1], [], []>} : vector<1x80xbf16>, vector<80x120xbf16>, vector<1x120xf32> -> vector<1x120xf32>
    %156 = arith.addf %151, %155 : vector<1x120xf32>
    %cst_88 = arith.constant 0.000000e+00 : f32
    %157 = vector.broadcast %cst_88 : f32 to vector<1x120xf32>
    %158 = arith.maximumf %156, %157 : vector<1x120xf32>
    %159 = arith.truncf %158 : vector<1x120xf32> to vector<1x120xbf16>
    %c0_89 = arith.constant 0 : index
    %c0_90 = arith.constant 0 : index
    %160 = vector.load %arg8[%c0_89, %c0_90] : memref<120x84xbf16, #tpu.memory_space<vmem>>, vector<120x84xbf16>
    %cst_91 = arith.constant dense<0.000000e+00> : vector<1x84xf32>
    %161 = tpu.matmul %159, %160, %cst_91 {dimension_numbers = #tpu.dot_dimension_numbers<[1], [0], [0], [1], [0, 0, 1, 1], [], []>} : vector<1x120xbf16>, vector<120x84xbf16>, vector<1x84xf32> -> vector<1x84xf32>
    %c0_92 = arith.constant 0 : index
    %c0_93 = arith.constant 0 : index
    %162 = vector.load %arg9[%c0_92, %c0_93] : memref<1x84xf32, #tpu.memory_space<vmem>>, vector<1x84xf32>
    %163 = arith.addf %161, %162 : vector<1x84xf32>
    %cst_94 = arith.constant 0.000000e+00 : f32
    %164 = vector.broadcast %cst_94 : f32 to vector<1x84xf32>
    %165 = arith.maximumf %163, %164 : vector<1x84xf32>
    %166 = arith.truncf %165 : vector<1x84xf32> to vector<1x84xbf16>
    %c0_95 = arith.constant 0 : index
    %c0_96 = arith.constant 0 : index
    %167 = vector.load %arg10[%c0_95, %c0_96] : memref<84x11xbf16, #tpu.memory_space<vmem>>, vector<84x11xbf16>
    %cst_97 = arith.constant dense<0.000000e+00> : vector<1x11xf32>
    %168 = tpu.matmul %166, %167, %cst_97 {dimension_numbers = #tpu.dot_dimension_numbers<[1], [0], [0], [1], [0, 0, 1, 1], [], []>} : vector<1x84xbf16>, vector<84x11xbf16>, vector<1x11xf32> -> vector<1x11xf32>
    %c0_98 = arith.constant 0 : index
    %c0_99 = arith.constant 0 : index
    %169 = vector.load %arg11[%c0_98, %c0_99] : memref<1x11xf32, #tpu.memory_space<vmem>>, vector<1x11xf32>
    %170 = arith.addf %168, %169 : vector<1x11xf32>
    %c0_100 = arith.constant 0 : index
    %c0_101 = arith.constant 0 : index
    %c0_102 = arith.constant 0 : index
    %171 = vector.load %arg12[%c0_100, %c0_101, %c0_102] : memref<1x1x11xf32, #tpu.memory_space<vmem>>, vector<1x1x11xf32>
    %172 = vector.shape_cast %171 : vector<1x1x11xf32> to vector<1x11xf32>
    %173 = vector.shape_cast %170 : vector<1x11xf32> to vector<1x1x11xf32>
    tpu.vector_store %arg12[%c0_100, %c0_101, %c0_102], %173 {strides = array<i32>} : memref<1x1x11xf32, #tpu.memory_space<vmem>>, vector<1x1x11xf32>,
    return
  }
  func.func @transform_0(%arg0: i32) -> (i32, i32, i32) {
    %c0_i32 = arith.constant 0 : i32
    %c0_i32_0 = arith.constant 0 : i32
    %c0_i32_1 = arith.constant 0 : i32
    return %arg0, %c0_i32, %c0_i32_0 : i32, i32, i32
  }
  func.func @transform_1(%arg0: i32) -> (i32, i32, i32) {
    %c0_i32 = arith.constant 0 : i32
    %c0_i32_0 = arith.constant 0 : i32
    %c0_i32_1 = arith.constant 0 : i32
    %c0_i32_2 = arith.constant 0 : i32
    return %c0_i32, %c0_i32_0, %c0_i32_1 : i32, i32, i32
  }
  func.func @transform_2(%arg0: i32) -> (i32, i32) {
    %c0_i32 = arith.constant 0 : i32
    %c0_i32_0 = arith.constant 0 : i32
    %c0_i32_1 = arith.constant 0 : i32
    return %c0_i32, %c0_i32_0 : i32, i32
  }
  func.func @transform_3(%arg0: i32) -> (i32, i32, i32) {
    %c0_i32 = arith.constant 0 : i32
    %c0_i32_0 = arith.constant 0 : i32
    %c0_i32_1 = arith.constant 0 : i32
    %c0_i32_2 = arith.constant 0 : i32
    return %c0_i32, %c0_i32_0, %c0_i32_1 : i32, i32, i32
  }
  func.func @transform_4(%arg0: i32) -> (i32, i32) {
    %c0_i32 = arith.constant 0 : i32
    %c0_i32_0 = arith.constant 0 : i32
    %c0_i32_1 = arith.constant 0 : i32
    return %c0_i32, %c0_i32_0 : i32, i32
  }
  func.func @transform_5(%arg0: i32) -> (i32, i32, i32) {
    %c0_i32 = arith.constant 0 : i32
    %c0_i32_0 = arith.constant 0 : i32
    %c0_i32_1 = arith.constant 0 : i32
    %c0_i32_2 = arith.constant 0 : i32
    return %c0_i32, %c0_i32_0, %c0_i32_1 : i32, i32, i32
  }
  func.func @transform_6(%arg0: i32) -> (i32, i32) {
    %c0_i32 = arith.constant 0 : i32
    %c0_i32_0 = arith.constant 0 : i32
    %c0_i32_1 = arith.constant 0 : i32
    return %c0_i32, %c0_i32_0 : i32, i32
  }
  func.func @transform_7(%arg0: i32) -> (i32, i32) {
    %c0_i32 = arith.constant 0 : i32
    %c0_i32_0 = arith.constant 0 : i32
    %c0_i32_1 = arith.constant 0 : i32
    return %c0_i32, %c0_i32_0 : i32, i32
  }
  func.func @transform_8(%arg0: i32) -> (i32, i32) {
    %c0_i32 = arith.constant 0 : i32
    %c0_i32_0 = arith.constant 0 : i32
    %c0_i32_1 = arith.constant 0 : i32
    return %c0_i32, %c0_i32_0 : i32, i32
  }
  func.func @transform_9(%arg0: i32) -> (i32, i32) {
    %c0_i32 = arith.constant 0 : i32
    %c0_i32_0 = arith.constant 0 : i32
    %c0_i32_1 = arith.constant 0 : i32
    return %c0_i32, %c0_i32_0 : i32, i32
  }
  func.func @transform_10(%arg0: i32) -> (i32, i32) {
    %c0_i32 = arith.constant 0 : i32
    %c0_i32_0 = arith.constant 0 : i32
    %c0_i32_1 = arith.constant 0 : i32
    return %c0_i32, %c0_i32_0 : i32, i32
  }
  func.func @transform_11(%arg0: i32) -> (i32, i32, i32) {
    %c0_i32 = arith.constant 0 : i32
    %c0_i32_0 = arith.constant 0 : i32
    %c0_i32_1 = arith.constant 0 : i32
    return %arg0, %c0_i32, %c0_i32_0 : i32, i32, i32
  }
}

</mosaic_0001>

<llo_original>
// kernel: cnn_forward.1
$region0: #{cnn_forward.1}
  #allocation0 [shape = 'u32[]', space=smem, size = 0x4, offset = 0x4, fixed_abs, tag = 'smem constant byte address 0x4 - core index']
  #allocation1 [shape = 'u32[144,128]{1,0:T(1,128)}', space=vmem, size = 0x12000, scoped, tag = 'internal scratch']
  %s0 = inlined_call_operand.vmem [shape: bf16[2,32,96], index: 0, kind: input, shape index: {}]
  %s1 = inlined_call_operand.vmem [shape: bf16[5,96,168], index: 1, kind: input, shape index: {}]
  %s2 = inlined_call_operand.vmem [shape: f32[1,84], index: 2, kind: input, shape index: {}]
  %s3 = inlined_call_operand.vmem [shape: bf16[5,84,160], index: 3, kind: input, shape index: {}]
  %s4 = inlined_call_operand.vmem [shape: f32[1,80], index: 4, kind: input, shape index: {}]
  %s5 = inlined_call_operand.vmem [shape: bf16[5,80,120], index: 5, kind: input, shape index: {}]
  %s6 = inlined_call_operand.vmem [shape: f32[1,120], index: 6, kind: input, shape index: {}]
  %s7 = inlined_call_operand.vmem [shape: bf16[120,84], index: 7, kind: input, shape index: {}]
  %s8 = inlined_call_operand.vmem [shape: f32[1,84], index: 8, kind: input, shape index: {}]
  %s9 = inlined_call_operand.vmem [shape: bf16[84,11], index: 9, kind: input, shape index: {}]
  %s10 = inlined_call_operand.vmem [shape: f32[1,11], index: 10, kind: input, shape index: {}]
  %s11 = inlined_call_operand.hbm [shape: f32[2,1,11], index: 11, kind: output, shape index: {}]
  %s12 = sld [smem:[#allocation0]]
  $region77: #{cnn_forward.1} parent=0
    _
  %s14 = ssub.s32 1, %s12
  %s15 = scalar_select 0, %s14, %s12
  $region1: #{cnn_forward.1} parent=0
    #allocation2 [shape = 'u8[1024]{0}', space=vmem, size = 0x400, scoped, tag = 'output window, operand 0']
    #allocation3 [shape = 's32[2]{0}', space=sflag, size = 0x8, scoped, tag = 'scoped memory for cnn_forward.1']
    %16 = vsyncpa [#allocation3], 0
    %s17 = scalar_lea.sflag [#allocation3], 1
    %18 = vsyncpa %s17, 0
    loop: start=0, step=1, limit=4
    $region2: #{cnn_forward.1} parent=1 // loop_pre_header
      _
    $region3: #{cnn_forward.1} parent=1 // loop_header
      %s20 = sphi 0, %s24
      %p21 = scmp.ge.s32.totalorder %s20, 4
      %s30 = sphi 0, %s32
      %s33 = sphi 0, %s30
      %s34 = sphi 0, %s33
      %s50 = sphi 0, %s34
      %s54 = sphi 0, %s54
      %s56 = sphi 0, %s54
      %s57 = sphi 0, %s56
      %s71 = sphi 0, %s57
      %s75 = sphi 0, %s75
      %s77 = sphi 0, %s75
      %s78 = sphi 0, %s77
      %s92 = sphi 0, %s78
      %s96 = sphi 0, %s96
      %s98 = sphi 0, %s96
      %s99 = sphi 0, %s98
      %s113 = sphi 0, %s99
      %s117 = sphi 0, %s117
      %s119 = sphi 0, %s117
      %s120 = sphi 0, %s119
      %s134 = sphi 0, %s120
      %s138 = sphi 0, %s138
      %s140 = sphi 0, %s138
      %s141 = sphi 0, %s140
      %s155 = sphi 0, %s141
      %s159 = sphi 0, %s159
      %s161 = sphi 0, %s159
      %s162 = sphi 0, %s161
      %s176 = sphi 0, %s162
      %s180 = sphi 0, %s180
      %s182 = sphi 0, %s180
      %s183 = sphi 0, %s182
      %s197 = sphi 0, %s183
      %s201 = sphi 0, %s201
      %s203 = sphi 0, %s201
      %s204 = sphi 0, %s203
      %s218 = sphi 0, %s204
      %s222 = sphi 0, %s222
      %s224 = sphi 0, %s222
      %s225 = sphi 0, %s224
      %s239 = sphi 0, %s225
      %s243 = sphi 0, %s243
      %s245 = sphi 0, %s243
      %s246 = sphi 0, %s245
      %s260 = sphi 0, %s246
      %s266 = sphi 0, %s268
      %s269 = sphi 0, %s266
      %s270 = sphi 0, %s269
      %s286 = sphi 0, %s270
    $region4: #{cnn_forward.1} parent=1 // loop_header_branch
      %23 = sbr.rel (%p21) target = $region8
    $region5: #{cnn_forward.1} parent=1 // loop_body
      %s25 = ssub.s32 %s20, 1
      %s26 = ssub.s32 %s20, 2
      %s27 = sadd.s32 %s20, 1
      %s28 = ssub.s32 %s20, %s27
      %p29 = scmp.eq.s32.totalorder %s28, 0
      %s31 = sadd.s32 %s30, 1
      %s32 = scalar_select %p29, %s30, %s31
      %p35 = pneg %p29
      %p36 = scmp.eq.s32.totalorder %s20, 1
      %p37 = por %p35, %p36
      %p38 = scmp.ne.s32.totalorder %s30, %s33
      %p39 = scmp.eq.s32.totalorder %s20, 0
      %p40 = por %p38, %p39
      %p41 = scmp.ne.s32.totalorder %s30, %s33
      %p42 = scmp.eq.s32.totalorder %s25, 1
      %p43 = por %p41, %p42
      %p44 = scmp.ne.s32.totalorder %s33, %s34
      %p45 = scmp.eq.s32.totalorder %s25, 0
      %p46 = por %p44, %p45
      %p47 = scmp.ne.s32.totalorder %s33, %s34
      %p48 = scmp.eq.s32.totalorder %s26, 1
      %p49 = por %p47, %p48
      %p51 = scmp.ne.s32.totalorder %s34, %s50
      %p52 = scmp.eq.s32.totalorder %s26, 0
      %p53 = por %p51, %p52
      %s55 = sadd.s32 %s54, 1
      %p58 = scmp.eq.s32.totalorder %s20, 1
      %p59 = scmp.ne.s32.totalorder %s54, %s56
      %p60 = scmp.eq.s32.totalorder %s20, 0
      %p61 = por %p59, %p60
      %p62 = scmp.ne.s32.totalorder %s54, %s56
      %p63 = scmp.eq.s32.totalorder %s25, 1
      %p64 = por %p62, %p63
      %p65 = scmp.ne.s32.totalorder %s56, %s57
      %p66 = scmp.eq.s32.totalorder %s25, 0
      %p67 = por %p65, %p66
      %p68 = scmp.ne.s32.totalorder %s56, %s57
      %p69 = scmp.eq.s32.totalorder %s26, 1
      %p70 = por %p68, %p69
      %p72 = scmp.ne.s32.totalorder %s57, %s71
      %p73 = scmp.eq.s32.totalorder %s26, 0
      %p74 = por %p72, %p73
      %s76 = sadd.s32 %s75, 1
      %p79 = scmp.eq.s32.totalorder %s20, 1
      %p80 = scmp.ne.s32.totalorder %s75, %s77
      %p81 = scmp.eq.s32.totalorder %s20, 0
      %p82 = por %p80, %p81
      %p83 = scmp.ne.s32.totalorder %s75, %s77
      %p84 = scmp.eq.s32.totalorder %s25, 1
      %p85 = por %p83, %p84
      %p86 = scmp.ne.s32.totalorder %s77, %s78
      %p87 = scmp.eq.s32.totalorder %s25, 0
      %p88 = por %p86, %p87
      %p89 = scmp.ne.s32.totalorder %s77, %s78
      %p90 = scmp.eq.s32.totalorder %s26, 1
      %p91 = por %p89, %p90
      %p93 = scmp.ne.s32.totalorder %s78, %s92
      %p94 = scmp.eq.s32.totalorder %s26, 0
      %p95 = por %p93, %p94
      %s97 = sadd.s32 %s96, 1
      %p100 = scmp.eq.s32.totalorder %s20, 1
      %p101 = scmp.ne.s32.totalorder %s96, %s98
      %p102 = scmp.eq.s32.totalorder %s20, 0
      %p103 = por %p101, %p102
      %p104 = scmp.ne.s32.totalorder %s96, %s98
      %p105 = scmp.eq.s32.totalorder %s25, 1
      %p106 = por %p104, %p105
      %p107 = scmp.ne.s32.totalorder %s98, %s99
      %p108 = scmp.eq.s32.totalorder %s25, 0
      %p109 = por %p107, %p108
      %p110 = scmp.ne.s32.totalorder %s98, %s99
      %p111 = scmp.eq.s32.totalorder %s26, 1
      %p112 = por %p110, %p111
      %p114 = scmp.ne.s32.totalorder %s99, %s113
      %p115 = scmp.eq.s32.totalorder %s26, 0
      %p116 = por %p114, %p115
      %s118 = sadd.s32 %s117, 1
      %p121 = scmp.eq.s32.totalorder %s20, 1
      %p122 = scmp.ne.s32.totalorder %s117, %s119
      %p123 = scmp.eq.s32.totalorder %s20, 0
      %p124 = por %p122, %p123
      %p125 = scmp.ne.s32.totalorder %s117, %s119
      %p126 = scmp.eq.s32.totalorder %s25, 1
      %p127 = por %p125, %p126
      %p128 = scmp.ne.s32.totalorder %s119, %s120
      %p129 = scmp.eq.s32.totalorder %s25, 0
      %p130 = por %p128, %p129
      %p131 = scmp.ne.s32.totalorder %s119, %s120
      %p132 = scmp.eq.s32.totalorder %s26, 1
      %p133 = por %p131, %p132
      %p135 = scmp.ne.s32.totalorder %s120, %s134
      %p136 = scmp.eq.s32.totalorder %s26, 0
      %p137 = por %p135, %p136
      %s139 = sadd.s32 %s138, 1
      %p142 = scmp.eq.s32.totalorder %s20, 1
      %p143 = scmp.ne.s32.totalorder %s138, %s140
      %p144 = scmp.eq.s32.totalorder %s20, 0
      %p145 = por %p143, %p144
      %p146 = scmp.ne.s32.totalorder %s138, %s140
      %p147 = scmp.eq.s32.totalorder %s25, 1
      %p148 = por %p146, %p147
      %p149 = scmp.ne.s32.totalorder %s140, %s141
      %p150 = scmp.eq.s32.totalorder %s25, 0
      %p151 = por %p149, %p150
      %p152 = scmp.ne.s32.totalorder %s140, %s141
      %p153 = scmp.eq.s32.totalorder %s26, 1
      %p154 = por %p152, %p153
      %p156 = scmp.ne.s32.totalorder %s141, %s155
      %p157 = scmp.eq.s32.totalorder %s26, 0
      %p158 = por %p156, %p157
      %s160 = sadd.s32 %s159, 1
      %p163 = scmp.eq.s32.totalorder %s20, 1
      %p164 = scmp.ne.s32.totalorder %s159, %s161
      %p165 = scmp.eq.s32.totalorder %s20, 0
      %p166 = por %p164, %p165
      %p167 = scmp.ne.s32.totalorder %s159, %s161
      %p168 = scmp.eq.s32.totalorder %s25, 1
      %p169 = por %p167, %p168
      %p170 = scmp.ne.s32.totalorder %s161, %s162
      %p171 = scmp.eq.s32.totalorder %s25, 0
      %p172 = por %p170, %p171
      %p173 = scmp.ne.s32.totalorder %s161, %s162
      %p174 = scmp.eq.s32.totalorder %s26, 1
      %p175 = por %p173, %p174
      %p177 = scmp.ne.s32.totalorder %s162, %s176
      %p178 = scmp.eq.s32.totalorder %s26, 0
      %p179 = por %p177, %p178
      %s181 = sadd.s32 %s180, 1
      %p184 = scmp.eq.s32.totalorder %s20, 1
      %p185 = scmp.ne.s32.totalorder %s180, %s182
      %p186 = scmp.eq.s32.totalorder %s20, 0
      %p187 = por %p185, %p186
      %p188 = scmp.ne.s32.totalorder %s180, %s182
      %p189 = scmp.eq.s32.totalorder %s25, 1
      %p190 = por %p188, %p189
      %p191 = scmp.ne.s32.totalorder %s182, %s183
      %p192 = scmp.eq.s32.totalorder %s25, 0
      %p193 = por %p191, %p192
      %p194 = scmp.ne.s32.totalorder %s182, %s183
      %p195 = scmp.eq.s32.totalorder %s26, 1
      %p196 = por %p194, %p195
      %p198 = scmp.ne.s32.totalorder %s183, %s197
      %p199 = scmp.eq.s32.totalorder %s26, 0
      %p200 = por %p198, %p199
      %s202 = sadd.s32 %s201, 1
      %p205 = scmp.eq.s32.totalorder %s20, 1
      %p206 = scmp.ne.s32.totalorder %s201, %s203
      %p207 = scmp.eq.s32.totalorder %s20, 0
      %p208 = por %p206, %p207
      %p209 = scmp.ne.s32.totalorder %s201, %s203
      %p210 = scmp.eq.s32.totalorder %s25, 1
      %p211 = por %p209, %p210
      %p212 = scmp.ne.s32.totalorder %s203, %s204
      %p213 = scmp.eq.s32.totalorder %s25, 0
      %p214 = por %p212, %p213
      %p215 = scmp.ne.s32.totalorder %s203, %s204
      %p216 = scmp.eq.s32.totalorder %s26, 1
      %p217 = por %p215, %p216
      %p219 = scmp.ne.s32.totalorder %s204, %s218
      %p220 = scmp.eq.s32.totalorder %s26, 0
      %p221 = por %p219, %p220
      %s223 = sadd.s32 %s222, 1
      %p226 = scmp.eq.s32.totalorder %s20, 1
      %p227 = scmp.ne.s32.totalorder %s222, %s224
      %p228 = scmp.eq.s32.totalorder %s20, 0
      %p229 = por %p227, %p228
      %p230 = scmp.ne.s32.totalorder %s222, %s224
      %p231 = scmp.eq.s32.totalorder %s25, 1
      %p232 = por %p230, %p231
      %p233 = scmp.ne.s32.totalorder %s224, %s225
      %p234 = scmp.eq.s32.totalorder %s25, 0
      %p235 = por %p233, %p234
      %p236 = scmp.ne.s32.totalorder %s224, %s225
      %p237 = scmp.eq.s32.totalorder %s26, 1
      %p238 = por %p236, %p237
      %p240 = scmp.ne.s32.totalorder %s225, %s239
      %p241 = scmp.eq.s32.totalorder %s26, 0
      %p242 = por %p240, %p241
      %s244 = sadd.s32 %s243, 1
      %p247 = scmp.eq.s32.totalorder %s20, 1
      %p248 = scmp.ne.s32.totalorder %s243, %s245
      %p249 = scmp.eq.s32.totalorder %s20, 0
      %p250 = por %p248, %p249
      %p251 = scmp.ne.s32.totalorder %s243, %s245
      %p252 = scmp.eq.s32.totalorder %s25, 1
      %p253 = por %p251, %p252
      %p254 = scmp.ne.s32.totalorder %s245, %s246
      %p255 = scmp.eq.s32.totalorder %s25, 0
      %p256 = por %p254, %p255
      %p257 = scmp.ne.s32.totalorder %s245, %s246
      %p258 = scmp.eq.s32.totalorder %s26, 1
      %p259 = por %p257, %p258
      %p261 = scmp.ne.s32.totalorder %s246, %s260
      %p262 = scmp.eq.s32.totalorder %s26, 0
      %p263 = por %p261, %p262
      %s264 = ssub.s32 %s20, %s27
      %p265 = scmp.eq.s32.totalorder %s264, 0
      %s267 = sadd.s32 %s266, 1
      %s268 = scalar_select %p265, %s266, %s267
      %p271 = pneg %p265
      %p272 = scmp.eq.s32.totalorder %s20, 1
      %p273 = por %p271, %p272
      %p274 = scmp.ne.s32.totalorder %s266, %s269
      %p275 = scmp.eq.s32.totalorder %s20, 0
      %p276 = por %p274, %p275
      %p277 = scmp.ne.s32.totalorder %s266, %s269
      %p278 = scmp.eq.s32.totalorder %s25, 1
      %p279 = por %p277, %p278
      %p280 = scmp.ne.s32.totalorder %s269, %s270
      %p281 = scmp.eq.s32.totalorder %s25, 0
      %p282 = por %p280, %p281
      %p283 = scmp.ne.s32.totalorder %s269, %s270
      %p284 = scmp.eq.s32.totalorder %s26, 1
      %p285 = por %p283, %p284
      %p287 = scmp.ne.s32.totalorder %s270, %s286
      %p288 = scmp.eq.s32.totalorder %s26, 0
      %p289 = por %p287, %p288
      %p290 = scmp.le.s32.totalorder 1, %s20
      %p291 = scmp.lt.s32.totalorder %s20, 3
      %p292 = pnand %p290, %p291
      %p293 = pneg %p292
      // Predicated region
      $region9: #{cnn_forward.1} parent=5 // pred_check
        _
      $region10: #{cnn_forward.1} parent=5 // pred_check_branch
        %295 = sbr.rel (%p292) target = $region12
      $region11: #{cnn_forward.1} parent=5 // pred_region
        %s296 = ssub.s32 %s20, 1
        // Predicated region
        $region13: #{cnn_forward.1} parent=11 // pred_check
          %p297 = pneg %p67
        $region14: #{cnn_forward.1} parent=11 // pred_check_branch
          %299 = sbr.rel (%p297) target = $region16
        $region15: #{cnn_forward.1} parent=11 // pred_region
          _
        $region16: #{cnn_forward.1} parent=11 // pred_fallthru
          _
        // Predicated region
        $region17: #{cnn_forward.1} parent=11 // pred_check
          %p300 = pneg %p88
        $region18: #{cnn_forward.1} parent=11 // pred_check_branch
          %302 = sbr.rel (%p300) target = $region20
        $region19: #{cnn_forward.1} parent=11 // pred_region
          _
        $region20: #{cnn_forward.1} parent=11 // pred_fallthru
          _
        // Predicated region
        $region21: #{cnn_forward.1} parent=11 // pred_check
          %p303 = pneg %p109
        $region22: #{cnn_forward.1} parent=11 // pred_check_branch
          %305 = sbr.rel (%p303) target = $region24
        $region23: #{cnn_forward.1} parent=11 // pred_region
          _
        $region24: #{cnn_forward.1} parent=11 // pred_fallthru
          _
        // Predicated region
        $region25: #{cnn_forward.1} parent=11 // pred_check
          %p306 = pneg %p130
        $region26: #{cnn_forward.1} parent=11 // pred_check_branch
          %308 = sbr.rel (%p306) target = $region28
        $region27: #{cnn_forward.1} parent=11 // pred_region
          _
        $region28: #{cnn_forward.1} parent=11 // pred_fallthru
          _
        // Predicated region
        $region29: #{cnn_forward.1} parent=11 // pred_check
          %p309 = pneg %p151
        $region30: #{cnn_forward.1} parent=11 // pred_check_branch
          %311 = sbr.rel (%p309) target = $region32
        $region31: #{cnn_forward.1} parent=11 // pred_region
          _
        $region32: #{cnn_forward.1} parent=11 // pred_fallthru
          _
        // Predicated region
        $region33: #{cnn_forward.1} parent=11 // pred_check
          %p312 = pneg %p172
        $region34: #{cnn_forward.1} parent=11 // pred_check_branch
          %314 = sbr.rel (%p312) target = $region36
        $region35: #{cnn_forward.1} parent=11 // pred_region
          _
        $region36: #{cnn_forward.1} parent=11 // pred_fallthru
          _
        // Predicated region
        $region37: #{cnn_forward.1} parent=11 // pred_check
          %p315 = pneg %p193
        $region38: #{cnn_forward.1} parent=11 // pred_check_branch
          %317 = sbr.rel (%p315) target = $region40
        $region39: #{cnn_forward.1} parent=11 // pred_region
          _
        $region40: #{cnn_forward.1} parent=11 // pred_fallthru
          _
        // Predicated region
        $region41: #{cnn_forward.1} parent=11 // pred_check
          %p318 = pneg %p214
        $region42: #{cnn_forward.1} parent=11 // pred_check_branch
          %320 = sbr.rel (%p318) target = $region44
        $region43: #{cnn_forward.1} parent=11 // pred_region
          _
        $region44: #{cnn_forward.1} parent=11 // pred_fallthru
          _
        // Predicated region
        $region45: #{cnn_forward.1} parent=11 // pred_check
          %p321 = pneg %p235
        $region46: #{cnn_forward.1} parent=11 // pred_check_branch
          %323 = sbr.rel (%p321) target = $region48
        $region47: #{cnn_forward.1} parent=11 // pred_region
          _
        $region48: #{cnn_forward.1} parent=11 // pred_fallthru
          _
        // Predicated region
        $region49: #{cnn_forward.1} parent=11 // pred_check
          %p324 = pneg %p256
        $region50: #{cnn_forward.1} parent=11 // pred_check_branch
          %326 = sbr.rel (%p324) target = $region52
        $region51: #{cnn_forward.1} parent=11 // pred_region
          _
        $region52: #{cnn_forward.1} parent=11 // pred_fallthru
          _
      $region12: #{cnn_forward.1} parent=5 // pred_fallthru
        _
      %p327 = scmp.lt.s32.totalorder %s20, 2
      // Predicated region
      $region53: #{cnn_forward.1} parent=5 // pred_check
        %p328 = pneg %p327
      $region54: #{cnn_forward.1} parent=5 // pred_check_branch
        %330 = sbr.rel (%p328) target = $region56
      $region55: #{cnn_forward.1} parent=5 // pred_region
        // Predicated region
        $region57: #{cnn_forward.1} parent=55 // pred_check
          %p331 = pneg %p40
        $region58: #{cnn_forward.1} parent=55 // pred_check_branch
          %333 = sbr.rel (%p331) target = $region60
        $region59: #{cnn_forward.1} parent=55 // pred_region
          %p334 = scmp.lt.s32.totalorder %s20, 1
          %s335 = scalar_select %p334, %s20, 1
          %s336 = smul.addr %s335, 4
          %s337 = smul.addr %s336, 4
          %s338 = scalar_lea.vmem %s0, %s337
        $region60: #{cnn_forward.1} parent=55 // pred_fallthru
          _
      $region56: #{cnn_forward.1} parent=5 // pred_fallthru
        _
      %p339 = scmp.le.s32.totalorder 1, %s20
      %p340 = scmp.lt.s32.totalorder %s20, 3
      %p341 = pnand %p339, %p340
      %p342 = pneg %p341
      // Predicated region
      $region61: #{cnn_forward.1} parent=5 // pred_check
        _
      $region62: #{cnn_forward.1} parent=5 // pred_check_branch
        %344 = sbr.rel (%p341) target = $region64
      $region63: #{cnn_forward.1} parent=5 // pred_region
        %s345 = ssub.s32 %s20, 1
        %p346 = scmp.lt.s32.totalorder %s25, 1
        %s347 = scalar_select %p346, %s25, 1
        %s348 = smul.addr %s347, 4
        %s349 = smul.addr %s348, 4
        %s350 = scalar_lea.vmem %s0, %s349
        %p351 = pneg %p46
        %p352 = pneg %p43
        %p353 = pneg %p67
        %p354 = pneg %p64
        %p355 = pneg %p88
        %p356 = pneg %p85
        %p357 = pneg %p109
        %p358 = pneg %p106
        %p359 = pneg %p130
        %p360 = pneg %p127
        %p361 = pneg %p151
        %p362 = pneg %p148
        %p363 = pneg %p172
        %p364 = pneg %p169
        %p365 = pneg %p193
        %p366 = pneg %p190
        %p367 = pneg %p214
        %p368 = pneg %p211
        %p369 = pneg %p235
        %p370 = pneg %p232
        %p371 = pneg %p256
        %p372 = pneg %p253
        %p373 = pneg %p282
        %p374 = pneg %p279
        %s375 = sand.u32 %s269, 1
        %s376 = scalar_lea.sflag [#allocation3], %s375
        %s377 = sand.u32 %s269, 1
        %s378 = scalar_lea.vmem [#allocation2], %s377
        %p379 = scmp.lt.s32.totalorder %s25, 1
        %s380 = scalar_select %p379, %s25, 1
        %s381 = smul.addr %s380, 4
        %s382 = smul.addr %s381, 4
        %s383 = scalar_lea.vmem %s0, %s382
        %v385 = vld [vmem:[%s383] sm:$0xf]
        %v386 = vld [vmem:[%s383 + $0x4] sm:$0xf]
        %v387 = vld [vmem:[%s383 + $0x8] sm:$0xf]
        %v388 = vld [vmem:[%s383 + $0xc] sm:$0xf]
        %v389 = vld [vmem:[%s1] sm:$0xff]
        %v390 = vld [vmem:[%s1 + $0x8] sm:$0xff]
        %v391 = vld [vmem:[%s1 + $0x10] sm:$0xff]
        %v392 = vld [vmem:[%s1 + $0x18] sm:$0xff]
        %v393 = vld [vmem:[%s1 + $0x20] sm:$0xff]
        %v394 = vld [vmem:[%s1 + $0x28] sm:$0xff]
        %v395 = vld [vmem:[%s1 + $0x30] sm:$0xff]
        %v396 = vld [vmem:[%s1 + $0x38] sm:$0xff]
        %v397 = vld [vmem:[%s1 + $0x40] sm:$0xff]
        %v398 = vld [vmem:[%s1 + $0x48] sm:$0xff]
        %v399 = vld [vmem:[%s1 + $0x50] sm:$0xff]
        %v400 = vld [vmem:[%s1 + $0x58] sm:$0xff]
        %v405 = vunpack.c.l.b16 %v385
        %v406 = vunpack.c.l.b16 %v386
        %v407 = vunpack.c.l.b16 %v387
        %v408 = vunpack.c.l.b16 %v388
        %v409 = vpack.c.b16 %v406, %v405
        %v410 = vpack.c.b16 %v408, %v407
        %v423 = vunpack.c.l.b16 %v389
        %v424 = vunpack.c.h.b16 %v389
        %v425 = vunpack.c.l.b16 %v390
        %v426 = vunpack.c.h.b16 %v390
        %v427 = vunpack.c.l.b16 %v391
        %v428 = vunpack.c.h.b16 %v391
        %v429 = vunpack.c.l.b16 %v392
        %v430 = vunpack.c.h.b16 %v392
        %v431 = vunpack.c.l.b16 %v393
        %v432 = vunpack.c.h.b16 %v393
        %v433 = vunpack.c.l.b16 %v394
        %v434 = vunpack.c.h.b16 %v394
        %v435 = vunpack.c.l.b16 %v395
        %v436 = vunpack.c.h.b16 %v395
        %v437 = vunpack.c.l.b16 %v396
        %v438 = vunpack.c.h.b16 %v396
        %v439 = vunpack.c.l.b16 %v397
        %v440 = vunpack.c.h.b16 %v397
        %v441 = vunpack.c.l.b16 %v398
        %v442 = vunpack.c.h.b16 %v398
        %v443 = vunpack.c.l.b16 %v399
        %v444 = vunpack.c.h.b16 %v399
        %v445 = vunpack.c.l.b16 %v400
        %v446 = vunpack.c.h.b16 %v400
        %v447 = vpack.c.b16 %v425, %v423
        %v448 = vpack.c.b16 %v426, %v424
        %v449 = vpack.c.b16 %v429, %v427
        %v450 = vpack.c.b16 %v430, %v428
        %v451 = vpack.c.b16 %v433, %v431
        %v452 = vpack.c.b16 %v434, %v432
        %v453 = vpack.c.b16 %v437, %v435
        %v454 = vpack.c.b16 %v438, %v436
        %v455 = vpack.c.b16 %v441, %v439
        %v456 = vpack.c.b16 %v442, %v440
        %v457 = vpack.c.b16 %v445, %v443
        %v458 = vpack.c.b16 %v446, %v444
        %vm471 = vcmask 785408
        %v473 = vsel %vm471, %v409, 0
        %v476 = vsel %vm471, %v410, 0
        %478 = vmatprep.subr.bf16.mxu0 %v448
        %479 = vmatpush1.bf16.msra.mxu0 %v447
        %480 = vmatprep.subr.bf16.mxu0 %v450
        %481 = vmatpush1.bf16.msra.mxu0 %v449
        %482 = vmatprep.subr.bf16.mxu0 %v452
        %483 = vmatpush1.bf16.msra.mxu0 %v451
        %484 = vmatprep.subr.bf16.mxu0 %v454
        %485 = vmatpush1.bf16.msra.mxu0 %v453
        %486 = vmatprep.subr.bf16.mxu0 %v456
        %487 = vmatpush1.bf16.msra.mxu0 %v455
        %488 = vmatprep.subr.bf16.mxu0 %v458
        %489 = vmatpush1.bf16.msra.mxu0 %v457
        %490 = vmatprep.subr.bf16.mxu0 0
        %491 = vmatpush1.bf16.msra.mxu0 0
        %492 = vmatprep.subr.bf16.mxu0 0
        %493 = vmatpush1.bf16.msra.mxu0 0
        %494 = vmatprep.subr.bf16.mxu0 0
        %495 = vmatpush1.bf16.msra.mxu0 0
        %496 = vmatprep.subr.bf16.mxu0 0
        %497 = vmatpush1.bf16.msra.mxu0 0
        %498 = vmatprep.subr.bf16.mxu0 0
        %499 = vmatpush1.bf16.msra.mxu0 0
        %500 = vmatprep.subr.bf16.mxu0 0
        %501 = vmatpush1.bf16.msra.mxu0 0
        %502 = vmatprep.subr.bf16.mxu0 0
        %503 = vmatpush1.bf16.msra.mxu0 0
        %504 = vmatprep.subr.bf16.mxu0 0
        %505 = vmatpush1.bf16.msra.mxu0 0
        %506 = vmatprep.subr.bf16.mxu0 0
        %507 = vmatpush1.bf16.msra.mxu0 0
        %508 = vmatprep.subr.bf16.mxu0 0
        %509 = vmatpush1.bf16.msra.mxu0 0
        %510 = vmatprep.mubr.bf16.mxu0 0
        %511 = vmatmul.mubr.bf16.gmra.mrb[0].mxu0 %v473
        %v512 = vpop.f32.mrb[0].mxu0
        %v513 = vadd.f32 0.0, %v512
        %v514 = vpop.f32.mrb[0].mxu0
        %v515 = vadd.f32 0.0, %v514
        %v516 = vpop.f32.mrb[0].mxu0
        %v517 = vadd.f32 0.0, %v516
        %v518 = vpop.f32.mrb[0].mxu0
        %v519 = vadd.f32 0.0, %v518
        %520 = vmatprep.mubr.bf16.mxu0 0
        %521 = vmatmul.mubr.bf16.gmra.mrb[0].mxu0 %v476
        %v522 = vpop.f32.mrb[0].mxu0
        %v523 = vadd.f32 0.0, %v522
        %v524 = vpop.f32.mrb[0].mxu0
        %v525 = vadd.f32 0.0, %v524
        %v526 = vpop.f32.mrb[0].mxu0
        %v527 = vadd.f32 0.0, %v526
        %v528 = vpop.f32.mrb[0].mxu0
        %v529 = vadd.f32 0.0, %v528
        %530 = vdwg.mxu0
        %s531 = scalar_lea.vmem %s1, 96
        %v532 = vld [vmem:[%s531] sm:$0xff]
        %v533 = vld [vmem:[%s531 + $0x8] sm:$0xff]
        %v534 = vld [vmem:[%s531 + $0x10] sm:$0xff]
        %v535 = vld [vmem:[%s531 + $0x18] sm:$0xff]
        %v536 = vld [vmem:[%s531 + $0x20] sm:$0xff]
        %v537 = vld [vmem:[%s531 + $0x28] sm:$0xff]
        %v538 = vld [vmem:[%s531 + $0x30] sm:$0xff]
        %v539 = vld [vmem:[%s531 + $0x38] sm:$0xff]
        %v540 = vld [vmem:[%s531 + $0x40] sm:$0xff]
        %v541 = vld [vmem:[%s531 + $0x48] sm:$0xff]
        %v542 = vld [vmem:[%s531 + $0x50] sm:$0xff]
        %v543 = vld [vmem:[%s531 + $0x58] sm:$0xff]
        %v556 = vunpack.c.l.b16 %v532
        %v557 = vunpack.c.h.b16 %v532
        %v558 = vunpack.c.l.b16 %v533
        %v559 = vunpack.c.h.b16 %v533
        %v560 = vunpack.c.l.b16 %v534
        %v561 = vunpack.c.h.b16 %v534
        %v562 = vunpack.c.l.b16 %v535
        %v563 = vunpack.c.h.b16 %v535
        %v564 = vunpack.c.l.b16 %v536
        %v565 = vunpack.c.h.b16 %v536
        %v566 = vunpack.c.l.b16 %v537
        %v567 = vunpack.c.h.b16 %v537
        %v568 = vunpack.c.l.b16 %v538
        %v569 = vunpack.c.h.b16 %v538
        %v570 = vunpack.c.l.b16 %v539
        %v571 = vunpack.c.h.b16 %v539
        %v572 = vunpack.c.l.b16 %v540
        %v573 = vunpack.c.h.b16 %v540
        %v574 = vunpack.c.l.b16 %v541
        %v575 = vunpack.c.h.b16 %v541
        %v576 = vunpack.c.l.b16 %v542
        %v577 = vunpack.c.h.b16 %v542
        %v578 = vunpack.c.l.b16 %v543
        %v579 = vunpack.c.h.b16 %v543
        %v580 = vpack.c.b16 %v558, %v556
        %v581 = vpack.c.b16 %v559, %v557
        %v582 = vpack.c.b16 %v562, %v560
        %v583 = vpack.c.b16 %v563, %v561
        %v584 = vpack.c.b16 %v566, %v564
        %v585 = vpack.c.b16 %v567, %v565
        %v586 = vpack.c.b16 %v570, %v568
        %v587 = vpack.c.b16 %v571, %v569
        %v588 = vpack.c.b16 %v574, %v572
        %v589 = vpack.c.b16 %v575, %v573
        %v590 = vpack.c.b16 %v578, %v576
        %v591 = vpack.c.b16 %v579, %v577
        %604 = vmatprep.subr.bf16.mxu0 %v581
        %605 = vmatpush1.bf16.msra.mxu0 %v580
        %606 = vmatprep.subr.bf16.mxu0 %v583
        %607 = vmatpush1.bf16.msra.mxu0 %v582
        %608 = vmatprep.subr.bf16.mxu0 %v585
        %609 = vmatpush1.bf16.msra.mxu0 %v584
        %610 = vmatprep.subr.bf16.mxu0 %v587
        %611 = vmatpush1.bf16.msra.mxu0 %v586
        %612 = vmatprep.subr.bf16.mxu0 %v589
        %613 = vmatpush1.bf16.msra.mxu0 %v588
        %614 = vmatprep.subr.bf16.mxu0 %v591
        %615 = vmatpush1.bf16.msra.mxu0 %v590
        %616 = vmatprep.subr.bf16.mxu0 0
        %617 = vmatpush1.bf16.msra.mxu0 0
        %618 = vmatprep.subr.bf16.mxu0 0
        %619 = vmatpush1.bf16.msra.mxu0 0
        %620 = vmatprep.subr.bf16.mxu0 0
        %621 = vmatpush1.bf16.msra.mxu0 0
        %622 = vmatprep.subr.bf16.mxu0 0
        %623 = vmatpush1.bf16.msra.mxu0 0
        %624 = vmatprep.subr.bf16.mxu0 0
        %625 = vmatpush1.bf16.msra.mxu0 0
        %626 = vmatprep.subr.bf16.mxu0 0
        %627 = vmatpush1.bf16.msra.mxu0 0
        %628 = vmatprep.subr.bf16.mxu0 0
        %629 = vmatpush1.bf16.msra.mxu0 0
        %630 = vmatprep.subr.bf16.mxu0 0
        %631 = vmatpush1.bf16.msra.mxu0 0
        %632 = vmatprep.subr.bf16.mxu0 0
        %633 = vmatpush1.bf16.msra.mxu0 0
        %634 = vmatprep.subr.bf16.mxu0 0
        %635 = vmatpush1.bf16.msra.mxu0 0
        %636 = vmatprep.mubr.bf16.mxu0 0
        %637 = vmatmul.mubr.bf16.gmra.mrb[0].mxu0 %v473
        %v638 = vpop.f32.mrb[0].mxu0
        %v639 = vadd.f32 0.0, %v638
        %v640 = vpop.f32.mrb[0].mxu0
        %v641 = vadd.f32 0.0, %v640
        %v642 = vpop.f32.mrb[0].mxu0
        %v643 = vadd.f32 0.0, %v642
        %v644 = vpop.f32.mrb[0].mxu0
        %v645 = vadd.f32 0.0, %v644
        %646 = vmatprep.mubr.bf16.mxu0 0
        %647 = vmatmul.mubr.bf16.gmra.mrb[0].mxu0 %v476
        %v648 = vpop.f32.mrb[0].mxu0
        %v649 = vadd.f32 0.0, %v648
        %v650 = vpop.f32.mrb[0].mxu0
        %v651 = vadd.f32 0.0, %v650
        %v652 = vpop.f32.mrb[0].mxu0
        %v653 = vadd.f32 0.0, %v652
        %v654 = vpop.f32.mrb[0].mxu0
        %v655 = vadd.f32 0.0, %v654
        %656 = vdwg.mxu0
        %v657 = vadd.f32 %v513, %v643
        %v658 = vadd.f32 %v515, %v645
        %v659 = vadd.f32 %v517, %v649
        %v660 = vadd.f32 %v519, %v651
        %v661 = vadd.f32 %v523, %v653
        %v662 = vadd.f32 %v525, %v655
        %v665 = vrot.slane %v639, 1
        %v666 = vrot.slane %v641, 1
        %v669 = vadd.f32 %v527, %v665
        %v670 = vadd.f32 %v529, %v666
        %s671 = scalar_lea.vmem %s1, 192
        %v672 = vld [vmem:[%s671] sm:$0xff]
        %v673 = vld [vmem:[%s671 + $0x8] sm:$0xff]
        %v674 = vld [vmem:[%s671 + $0x10] sm:$0xff]
        %v675 = vld [vmem:[%s671 + $0x18] sm:$0xff]
        %v676 = vld [vmem:[%s671 + $0x20] sm:$0xff]
        %v677 = vld [vmem:[%s671 + $0x28] sm:$0xff]
        %v678 = vld [vmem:[%s671 + $0x30] sm:$0xff]
        %v679 = vld [vmem:[%s671 + $0x38] sm:$0xff]
        %v680 = vld [vmem:[%s671 + $0x40] sm:$0xff]
        %v681 = vld [vmem:[%s671 + $0x48] sm:$0xff]
        %v682 = vld [vmem:[%s671 + $0x50] sm:$0xff]
        %v683 = vld [vmem:[%s671 + $0x58] sm:$0xff]
        %v696 = vunpack.c.l.b16 %v672
        %v697 = vunpack.c.h.b16 %v672
        %v698 = vunpack.c.l.b16 %v673
        %v699 = vunpack.c.h.b16 %v673
        %v700 = vunpack.c.l.b16 %v674
        %v701 = vunpack.c.h.b16 %v674
        %v702 = vunpack.c.l.b16 %v675
        %v703 = vunpack.c.h.b16 %v675
        %v704 = vunpack.c.l.b16 %v676
        %v705 = vunpack.c.h.b16 %v676
        %v706 = vunpack.c.l.b16 %v677
        %v707 = vunpack.c.h.b16 %v677
        %v708 = vunpack.c.l.b16 %v678
        %v709 = vunpack.c.h.b16 %v678
        %v710 = vunpack.c.l.b16 %v679
        %v711 = vunpack.c.h.b16 %v679
        %v712 = vunpack.c.l.b16 %v680
        %v713 = vunpack.c.h.b16 %v680
        %v714 = vunpack.c.l.b16 %v681
        %v715 = vunpack.c.h.b16 %v681
        %v716 = vunpack.c.l.b16 %v682
        %v717 = vunpack.c.h.b16 %v682
        %v718 = vunpack.c.l.b16 %v683
        %v719 = vunpack.c.h.b16 %v683
        %v720 = vpack.c.b16 %v698, %v696
        %v721 = vpack.c.b16 %v699, %v697
        %v722 = vpack.c.b16 %v702, %v700
        %v723 = vpack.c.b16 %v703, %v701
        %v724 = vpack.c.b16 %v706, %v704
        %v725 = vpack.c.b16 %v707, %v705
        %v726 = vpack.c.b16 %v710, %v708
        %v727 = vpack.c.b16 %v711, %v709
        %v728 = vpack.c.b16 %v714, %v712
        %v729 = vpack.c.b16 %v715, %v713
        %v730 = vpack.c.b16 %v718, %v716
        %v731 = vpack.c.b16 %v719, %v717
        %744 = vmatprep.subr.bf16.mxu0 %v721
        %745 = vmatpush1.bf16.msra.mxu0 %v720
        %746 = vmatprep.subr.bf16.mxu0 %v723
        %747 = vmatpush1.bf16.msra.mxu0 %v722
        %748 = vmatprep.subr.bf16.mxu0 %v725
        %749 = vmatpush1.bf16.msra.mxu0 %v724
        %750 = vmatprep.subr.bf16.mxu0 %v727
        %751 = vmatpush1.bf16.msra.mxu0 %v726
        %752 = vmatprep.subr.bf16.mxu0 %v729
        %753 = vmatpush1.bf16.msra.mxu0 %v728
        %754 = vmatprep.subr.bf16.mxu0 %v731
        %755 = vmatpush1.bf16.msra.mxu0 %v730
        %756 = vmatprep.subr.bf16.mxu0 0
        %757 = vmatpush1.bf16.msra.mxu0 0
        %758 = vmatprep.subr.bf16.mxu0 0
        %759 = vmatpush1.bf16.msra.mxu0 0
        %760 = vmatprep.subr.bf16.mxu0 0
        %761 = vmatpush1.bf16.msra.mxu0 0
        %762 = vmatprep.subr.bf16.mxu0 0
        %763 = vmatpush1.bf16.msra.mxu0 0
        %764 = vmatprep.subr.bf16.mxu0 0
        %765 = vmatpush1.bf16.msra.mxu0 0
        %766 = vmatprep.subr.bf16.mxu0 0
        %767 = vmatpush1.bf16.msra.mxu0 0
        %768 = vmatprep.subr.bf16.mxu0 0
        %769 = vmatpush1.bf16.msra.mxu0 0
        %770 = vmatprep.subr.bf16.mxu0 0
        %771 = vmatpush1.bf16.msra.mxu0 0
        %772 = vmatprep.subr.bf16.mxu0 0
        %773 = vmatpush1.bf16.msra.mxu0 0
        %774 = vmatprep.subr.bf16.mxu0 0
        %775 = vmatpush1.bf16.msra.mxu0 0
        %776 = vmatprep.mubr.bf16.mxu0 0
        %777 = vmatmul.mubr.bf16.gmra.mrb[0].mxu0 %v473
        %v778 = vpop.f32.mrb[0].mxu0
        %v779 = vadd.f32 0.0, %v778
        %v780 = vpop.f32.mrb[0].mxu0
        %v781 = vadd.f32 0.0, %v780
        %v782 = vpop.f32.mrb[0].mxu0
        %v783 = vadd.f32 0.0, %v782
        %v784 = vpop.f32.mrb[0].mxu0
        %v785 = vadd.f32 0.0, %v784
        %786 = vmatprep.mubr.bf16.mxu0 0
        %787 = vmatmul.mubr.bf16.gmra.mrb[0].mxu0 %v476
        %v788 = vpop.f32.mrb[0].mxu0
        %v789 = vadd.f32 0.0, %v788
        %v790 = vpop.f32.mrb[0].mxu0
        %v791 = vadd.f32 0.0, %v790
        %v792 = vpop.f32.mrb[0].mxu0
        %v793 = vadd.f32 0.0, %v792
        %v794 = vpop.f32.mrb[0].mxu0
        %v795 = vadd.f32 0.0, %v794
        %796 = vdwg.mxu0
        %v797 = vadd.f32 %v657, %v789
        %v798 = vadd.f32 %v658, %v791
        %v799 = vadd.f32 %v659, %v793
        %v800 = vadd.f32 %v660, %v795
        %v803 = vrot.slane %v779, 1
        %v804 = vrot.slane %v781, 1
        %v807 = vadd.f32 %v661, %v803
        %v808 = vadd.f32 %v662, %v804
        %v811 = vrot.slane %v783, 1
        %v812 = vrot.slane %v785, 1
        %v815 = vadd.f32 %v669, %v811
        %v816 = vadd.f32 %v670, %v812
        %s817 = scalar_lea.vmem %s1, 288
        %v818 = vld [vmem:[%s817] sm:$0xff]
        %v819 = vld [vmem:[%s817 + $0x8] sm:$0xff]
        %v820 = vld [vmem:[%s817 + $0x10] sm:$0xff]
        %v821 = vld [vmem:[%s817 + $0x18] sm:$0xff]
        %v822 = vld [vmem:[%s817 + $0x20] sm:$0xff]
        %v823 = vld [vmem:[%s817 + $0x28] sm:$0xff]
        %v824 = vld [vmem:[%s817 + $0x30] sm:$0xff]
        %v825 = vld [vmem:[%s817 + $0x38] sm:$0xff]
        %v826 = vld [vmem:[%s817 + $0x40] sm:$0xff]
        %v827 = vld [vmem:[%s817 + $0x48] sm:$0xff]
        %v828 = vld [vmem:[%s817 + $0x50] sm:$0xff]
        %v829 = vld [vmem:[%s817 + $0x58] sm:$0xff]
        %v842 = vunpack.c.l.b16 %v818
        %v843 = vunpack.c.h.b16 %v818
        %v844 = vunpack.c.l.b16 %v819
        %v845 = vunpack.c.h.b16 %v819
        %v846 = vunpack.c.l.b16 %v820
        %v847 = vunpack.c.h.b16 %v820
        %v848 = vunpack.c.l.b16 %v821
        %v849 = vunpack.c.h.b16 %v821
        %v850 = vunpack.c.l.b16 %v822
        %v851 = vunpack.c.h.b16 %v822
        %v852 = vunpack.c.l.b16 %v823
        %v853 = vunpack.c.h.b16 %v823
        %v854 = vunpack.c.l.b16 %v824
        %v855 = vunpack.c.h.b16 %v824
        %v856 = vunpack.c.l.b16 %v825
        %v857 = vunpack.c.h.b16 %v825
        %v858 = vunpack.c.l.b16 %v826
        %v859 = vunpack.c.h.b16 %v826
        %v860 = vunpack.c.l.b16 %v827
        %v861 = vunpack.c.h.b16 %v827
        %v862 = vunpack.c.l.b16 %v828
        %v863 = vunpack.c.h.b16 %v828
        %v864 = vunpack.c.l.b16 %v829
        %v865 = vunpack.c.h.b16 %v829
        %v866 = vpack.c.b16 %v844, %v842
        %v867 = vpack.c.b16 %v845, %v843
        %v868 = vpack.c.b16 %v848, %v846
        %v869 = vpack.c.b16 %v849, %v847
        %v870 = vpack.c.b16 %v852, %v850
        %v871 = vpack.c.b16 %v853, %v851
        %v872 = vpack.c.b16 %v856, %v854
        %v873 = vpack.c.b16 %v857, %v855
        %v874 = vpack.c.b16 %v860, %v858
        %v875 = vpack.c.b16 %v861, %v859
        %v876 = vpack.c.b16 %v864, %v862
        %v877 = vpack.c.b16 %v865, %v863
        %890 = vmatprep.subr.bf16.mxu0 %v867
        %891 = vmatpush1.bf16.msra.mxu0 %v866
        %892 = vmatprep.subr.bf16.mxu0 %v869
        %893 = vmatpush1.bf16.msra.mxu0 %v868
        %894 = vmatprep.subr.bf16.mxu0 %v871
        %895 = vmatpush1.bf16.msra.mxu0 %v870
        %896 = vmatprep.subr.bf16.mxu0 %v873
        %897 = vmatpush1.bf16.msra.mxu0 %v872
        %898 = vmatprep.subr.bf16.mxu0 %v875
        %899 = vmatpush1.bf16.msra.mxu0 %v874
        %900 = vmatprep.subr.bf16.mxu0 %v877
        %901 = vmatpush1.bf16.msra.mxu0 %v876
        %902 = vmatprep.subr.bf16.mxu0 0
        %903 = vmatpush1.bf16.msra.mxu0 0
        %904 = vmatprep.subr.bf16.mxu0 0
        %905 = vmatpush1.bf16.msra.mxu0 0
        %906 = vmatprep.subr.bf16.mxu0 0
        %907 = vmatpush1.bf16.msra.mxu0 0
        %908 = vmatprep.subr.bf16.mxu0 0
        %909 = vmatpush1.bf16.msra.mxu0 0
        %910 = vmatprep.subr.bf16.mxu0 0
        %911 = vmatpush1.bf16.msra.mxu0 0
        %912 = vmatprep.subr.bf16.mxu0 0
        %913 = vmatpush1.bf16.msra.mxu0 0
        %914 = vmatprep.subr.bf16.mxu0 0
        %915 = vmatpush1.bf16.msra.mxu0 0
        %916 = vmatprep.subr.bf16.mxu0 0
        %917 = vmatpush1.bf16.msra.mxu0 0
        %918 = vmatprep.subr.bf16.mxu0 0
        %919 = vmatpush1.bf16.msra.mxu0 0
        %920 = vmatprep.subr.bf16.mxu0 0
        %921 = vmatpush1.bf16.msra.mxu0 0
        %922 = vmatprep.mubr.bf16.mxu0 0
        %923 = vmatmul.mubr.bf16.gmra.mrb[0].mxu0 %v473
        %v924 = vpop.f32.mrb[0].mxu0
        %v925 = vadd.f32 0.0, %v924
        %v926 = vpop.f32.mrb[0].mxu0
        %v927 = vadd.f32 0.0, %v926
        %v928 = vpop.f32.mrb[0].mxu0
        %v929 = vadd.f32 0.0, %v928
        %v930 = vpop.f32.mrb[0].mxu0
        %v931 = vadd.f32 0.0, %v930
        %932 = vmatprep.mubr.bf16.mxu0 0
        %933 = vmatmul.mubr.bf16.gmra.mrb[0].mxu0 %v476
        %v934 = vpop.f32.mrb[0].mxu0
        %v935 = vadd.f32 0.0, %v934
        %v936 = vpop.f32.mrb[0].mxu0
        %v937 = vadd.f32 0.0, %v936
        %v938 = vpop.f32.mrb[0].mxu0
        %v939 = vadd.f32 0.0, %v938
        %v940 = vpop.f32.mrb[0].mxu0
        %v941 = vadd.f32 0.0, %v940
        %942 = vdwg.mxu0
        %v943 = vadd.f32 %v797, %v939
        %v944 = vadd.f32 %v798, %v941
        %v947 = vrot.slane %v925, 1
        %v948 = vrot.slane %v927, 1
        %v951 = vadd.f32 %v799, %v947
        %v952 = vadd.f32 %v800, %v948
        %v955 = vrot.slane %v929, 1
        %v956 = vrot.slane %v931, 1
        %v959 = vadd.f32 %v807, %v955
        %v960 = vadd.f32 %v808, %v956
        %v963 = vrot.slane %v935, 1
        %v964 = vrot.slane %v937, 1
        %v967 = vadd.f32 %v815, %v963
        %v968 = vadd.f32 %v816, %v964
        %s969 = scalar_lea.vmem %s1, 384
        %v970 = vld [vmem:[%s969] sm:$0xff]
        %v971 = vld [vmem:[%s969 + $0x8] sm:$0xff]
        %v972 = vld [vmem:[%s969 + $0x10] sm:$0xff]
        %v973 = vld [vmem:[%s969 + $0x18] sm:$0xff]
        %v974 = vld [vmem:[%s969 + $0x20] sm:$0xff]
        %v975 = vld [vmem:[%s969 + $0x28] sm:$0xff]
        %v976 = vld [vmem:[%s969 + $0x30] sm:$0xff]
        %v977 = vld [vmem:[%s969 + $0x38] sm:$0xff]
        %v978 = vld [vmem:[%s969 + $0x40] sm:$0xff]
        %v979 = vld [vmem:[%s969 + $0x48] sm:$0xff]
        %v980 = vld [vmem:[%s969 + $0x50] sm:$0xff]
        %v981 = vld [vmem:[%s969 + $0x58] sm:$0xff]
        %v994 = vunpack.c.l.b16 %v970
        %v995 = vunpack.c.h.b16 %v970
        %v996 = vunpack.c.l.b16 %v971
        %v997 = vunpack.c.h.b16 %v971
        %v998 = vunpack.c.l.b16 %v972
        %v999 = vunpack.c.h.b16 %v972
        %v1000 = vunpack.c.l.b16 %v973
        %v1001 = vunpack.c.h.b16 %v973
        %v1002 = vunpack.c.l.b16 %v974
        %v1003 = vunpack.c.h.b16 %v974
        %v1004 = vunpack.c.l.b16 %v975
        %v1005 = vunpack.c.h.b16 %v975
        %v1006 = vunpack.c.l.b16 %v976
        %v1007 = vunpack.c.h.b16 %v976
        %v1008 = vunpack.c.l.b16 %v977
        %v1009 = vunpack.c.h.b16 %v977
        %v1010 = vunpack.c.l.b16 %v978
        %v1011 = vunpack.c.h.b16 %v978
        %v1012 = vunpack.c.l.b16 %v979
        %v1013 = vunpack.c.h.b16 %v979
        %v1014 = vunpack.c.l.b16 %v980
        %v1015 = vunpack.c.h.b16 %v980
        %v1016 = vunpack.c.l.b16 %v981
        %v1017 = vunpack.c.h.b16 %v981
        %v1018 = vpack.c.b16 %v996, %v994
        %v1019 = vpack.c.b16 %v997, %v995
        %v1020 = vpack.c.b16 %v1000, %v998
        %v1021 = vpack.c.b16 %v1001, %v999
        %v1022 = vpack.c.b16 %v1004, %v1002
        %v1023 = vpack.c.b16 %v1005, %v1003
        %v1024 = vpack.c.b16 %v1008, %v1006
        %v1025 = vpack.c.b16 %v1009, %v1007
        %v1026 = vpack.c.b16 %v1012, %v1010
        %v1027 = vpack.c.b16 %v1013, %v1011
        %v1028 = vpack.c.b16 %v1016, %v1014
        %v1029 = vpack.c.b16 %v1017, %v1015
        %1042 = vmatprep.subr.bf16.mxu0 %v1019
        %1043 = vmatpush1.bf16.msra.mxu0 %v1018
        %1044 = vmatprep.subr.bf16.mxu0 %v1021
        %1045 = vmatpush1.bf16.msra.mxu0 %v1020
        %1046 = vmatprep.subr.bf16.mxu0 %v1023
        %1047 = vmatpush1.bf16.msra.mxu0 %v1022
        %1048 = vmatprep.subr.bf16.mxu0 %v1025
        %1049 = vmatpush1.bf16.msra.mxu0 %v1024
        %1050 = vmatprep.subr.bf16.mxu0 %v1027
        %1051 = vmatpush1.bf16.msra.mxu0 %v1026
        %1052 = vmatprep.subr.bf16.mxu0 %v1029
        %1053 = vmatpush1.bf16.msra.mxu0 %v1028
        %1054 = vmatprep.subr.bf16.mxu0 0
        %1055 = vmatpush1.bf16.msra.mxu0 0
        %1056 = vmatprep.subr.bf16.mxu0 0
        %1057 = vmatpush1.bf16.msra.mxu0 0
        %1058 = vmatprep.subr.bf16.mxu0 0
        %1059 = vmatpush1.bf16.msra.mxu0 0
        %1060 = vmatprep.subr.bf16.mxu0 0
        %1061 = vmatpush1.bf16.msra.mxu0 0
        %1062 = vmatprep.subr.bf16.mxu0 0
        %1063 = vmatpush1.bf16.msra.mxu0 0
        %1064 = vmatprep.subr.bf16.mxu0 0
        %1065 = vmatpush1.bf16.msra.mxu0 0
        %1066 = vmatprep.subr.bf16.mxu0 0
        %1067 = vmatpush1.bf16.msra.mxu0 0
        %1068 = vmatprep.subr.bf16.mxu0 0
        %1069 = vmatpush1.bf16.msra.mxu0 0
        %1070 = vmatprep.subr.bf16.mxu0 0
        %1071 = vmatpush1.bf16.msra.mxu0 0
        %1072 = vmatprep.subr.bf16.mxu0 0
        %1073 = vmatpush1.bf16.msra.mxu0 0
        %1074 = vmatprep.mubr.bf16.mxu0 0
        %1075 = vmatmul.mubr.bf16.gmra.mrb[0].mxu0 %v473
        %v1076 = vpop.f32.mrb[0].mxu0
        %v1077 = vadd.f32 0.0, %v1076
        %v1078 = vpop.f32.mrb[0].mxu0
        %v1079 = vadd.f32 0.0, %v1078
        %v1080 = vpop.f32.mrb[0].mxu0
        %v1081 = vadd.f32 0.0, %v1080
        %v1082 = vpop.f32.mrb[0].mxu0
        %v1083 = vadd.f32 0.0, %v1082
        %1084 = vmatprep.mubr.bf16.mxu0 0
        %1085 = vmatmul.mubr.bf16.gmra.mrb[0].mxu0 %v476
        %v1086 = vpop.f32.mrb[0].mxu0
        %v1087 = vadd.f32 0.0, %v1086
        %v1088 = vpop.f32.mrb[0].mxu0
        %v1089 = vadd.f32 0.0, %v1088
        %v1090 = vpop.f32.mrb[0].mxu0
        %v1091 = vadd.f32 0.0, %v1090
        %v1092 = vpop.f32.mrb[0].mxu0
        %v1093 = vadd.f32 0.0, %v1092
        %1094 = vdwg.mxu0
        %v1097 = vrot.slane %v1077, 1
        %v1098 = vrot.slane %v1079, 1
        %v1101 = vadd.f32 %v943, %v1097
        %v1102 = vadd.f32 %v944, %v1098
        %v1105 = vrot.slane %v1081, 1
        %v1106 = vrot.slane %v1083, 1
        %v1109 = vadd.f32 %v951, %v1105
        %v1110 = vadd.f32 %v952, %v1106
        %v1113 = vrot.slane %v1087, 1
        %v1114 = vrot.slane %v1089, 1
        %v1117 = vadd.f32 %v959, %v1113
        %v1118 = vadd.f32 %v960, %v1114
        %v1121 = vrot.slane %v1091, 1
        %v1122 = vrot.slane %v1093, 1
        %v1125 = vadd.f32 %v967, %v1121
        %v1126 = vadd.f32 %v968, %v1122
        %v1127 = vmax.f32 %v1101, %v1109
        %v1128 = vmax.f32 %v1102, %v1110
        %v1129 = vmax.f32 %v1117, %v1125
        %v1130 = vmax.f32 %v1118, %v1126
        %1133 = vrot.lane.b32.xlu0 %v1127, 44
        %v1134 = vpop.permute.xlu0 %1133
        %1135 = vrot.lane.b32.xlu0 %v1128, 44
        %v1136 = vpop.permute.xlu0 %1135
        %vm1137 = vcmask 359424
        %v1138 = vsel %vm1137, %v1134, %v1136
        %v1140 = vmax.f32 %v1127, %v1138
        %1143 = vrot.lane.b32.xlu0 %v1129, 44
        %v1144 = vpop.permute.xlu0 %1143
        %1145 = vrot.lane.b32.xlu0 %v1130, 44
        %v1146 = vpop.permute.xlu0 %1145
        %v1147 = vsel %vm1137, %v1144, %v1146
        %v1149 = vmax.f32 %v1129, %v1147
        %v1150 = vld [vmem:[%s2] sm:$0x1]
        %v1152 = vlaneseq
        %v1153 = vshrl.u32 %v1152, 7
        %v1154 = vsub.s32 0, %v1153
        %v1155 = vrot.slane %v1150, %v1154
        %v1157 = vadd.f32 %v1140, %v1155
        %v1158 = vmax.f32 %v1157, 0.0
        %v1159 = vpack.c.bf16 %v1158, %v1158
        %v1160 = vadd.f32 %v1149, %v1155
        %v1161 = vmax.f32 %v1160, 0.0
        %v1162 = vpack.c.bf16 %v1161, %v1161
        %v1163 = vld [vmem:[%s3] sm:$0xff]
        %v1164 = vld [vmem:[%s3 + $0x8] sm:$0xff]
        %v1165 = vld [vmem:[%s3 + $0x10] sm:$0xff]
        %v1166 = vld [vmem:[%s3 + $0x18] sm:$0xff]
        %v1167 = vld [vmem:[%s3 + $0x20] sm:$0xff]
        %v1168 = vld [vmem:[%s3 + $0x28] sm:$0xff]
        %v1169 = vld [vmem:[%s3 + $0x30] sm:$0xff]
        %v1170 = vld [vmem:[%s3 + $0x38] sm:$0xff]
        %v1171 = vld [vmem:[%s3 + $0x40] sm:$0xff]
        %v1172 = vld [vmem:[%s3 + $0x48] sm:$0xff]
        %v1173 = vld [vmem:[%s3 + $0x50] sm:$0x33]
        %v1185 = vunpack.c.l.b16 %v1163
        %v1186 = vunpack.c.h.b16 %v1163
        %v1187 = vunpack.c.l.b16 %v1164
        %v1188 = vunpack.c.h.b16 %v1164
        %v1189 = vunpack.c.l.b16 %v1165
        %v1190 = vunpack.c.h.b16 %v1165
        %v1191 = vunpack.c.l.b16 %v1166
        %v1192 = vunpack.c.h.b16 %v1166
        %v1193 = vunpack.c.l.b16 %v1167
        %v1194 = vunpack.c.h.b16 %v1167
        %v1195 = vunpack.c.l.b16 %v1168
        %v1196 = vunpack.c.h.b16 %v1168
        %v1197 = vunpack.c.l.b16 %v1169
        %v1198 = vunpack.c.h.b16 %v1169
        %v1199 = vunpack.c.l.b16 %v1170
        %v1200 = vunpack.c.h.b16 %v1170
        %v1201 = vunpack.c.l.b16 %v1171
        %v1202 = vunpack.c.h.b16 %v1171
        %v1203 = vunpack.c.l.b16 %v1172
        %v1204 = vunpack.c.h.b16 %v1172
        %v1205 = vunpack.c.l.b16 %v1173
        %v1206 = vunpack.c.h.b16 %v1173
        %v1207 = vpack.c.b16 %v1187, %v1185
        %v1208 = vpack.c.b16 %v1188, %v1186
        %v1209 = vpack.c.b16 %v1191, %v1189
        %v1210 = vpack.c.b16 %v1192, %v1190
        %v1211 = vpack.c.b16 %v1195, %v1193
        %v1212 = vpack.c.b16 %v1196, %v1194
        %v1213 = vpack.c.b16 %v1199, %v1197
        %v1214 = vpack.c.b16 %v1200, %v1198
        %v1215 = vpack.c.b16 %v1203, %v1201
        %v1216 = vpack.c.b16 %v1204, %v1202
        %v1217 = vpack.c.b16 %v1205, %v1205
        %v1218 = vpack.c.b16 %v1206, %v1206
        %vm1229 = vcmask 687104
        %v1231 = vsel %vm1229, %v1159, 0
        %vm1233 = vcmask 1041408
        %v1235 = vsel %vm1233, %v1217, 0
        %v1238 = vsel %vm1233, %v1218, 0
        %1240 = vmatprep.subr.bf16.mxu0 %v1208
        %1241 = vmatpush1.bf16.msra.mxu0 %v1207
        %1242 = vmatprep.subr.bf16.mxu0 %v1210
        %1243 = vmatpush1.bf16.msra.mxu0 %v1209
        %1244 = vmatprep.subr.bf16.mxu0 %v1212
        %1245 = vmatpush1.bf16.msra.mxu0 %v1211
        %1246 = vmatprep.subr.bf16.mxu0 %v1214
        %1247 = vmatpush1.bf16.msra.mxu0 %v1213
        %1248 = vmatprep.subr.bf16.mxu0 %v1216
        %1249 = vmatpush1.bf16.msra.mxu0 %v1215
        %1250 = vmatprep.subr.bf16.mxu0 %v1238
        %1251 = vmatpush1.bf16.msra.mxu0 %v1235
        %1252 = vmatprep.subr.bf16.mxu0 0
        %1253 = vmatpush1.bf16.msra.mxu0 0
        %1254 = vmatprep.subr.bf16.mxu0 0
        %1255 = vmatpush1.bf16.msra.mxu0 0
        %1256 = vmatprep.subr.bf16.mxu0 0
        %1257 = vmatpush1.bf16.msra.mxu0 0
        %1258 = vmatprep.subr.bf16.mxu0 0
        %1259 = vmatpush1.bf16.msra.mxu0 0
        %1260 = vmatprep.subr.bf16.mxu0 0
        %1261 = vmatpush1.bf16.msra.mxu0 0
        %1262 = vmatprep.subr.bf16.mxu0 0
        %1263 = vmatpush1.bf16.msra.mxu0 0
        %1264 = vmatprep.subr.bf16.mxu0 0
        %1265 = vmatpush1.bf16.msra.mxu0 0
        %1266 = vmatprep.subr.bf16.mxu0 0
        %1267 = vmatpush1.bf16.msra.mxu0 0
        %1268 = vmatprep.subr.bf16.mxu0 0
        %1269 = vmatpush1.bf16.msra.mxu0 0
        %1270 = vmatprep.subr.bf16.mxu0 0
        %1271 = vmatpush1.bf16.msra.mxu0 0
        %1272 = vmatprep.mubr.bf16.mxu0 0
        %1273 = vmatmul.mubr.bf16.gmra.mrb[0].mxu0 %v1231
        %v1274 = vpop.f32.mrb[0].mxu0
        %v1275 = vadd.f32 0.0, %v1274
        %v1276 = vpop.f32.mrb[0].mxu0
        %v1277 = vadd.f32 0.0, %v1276
        %v1278 = vpop.f32.mrb[0].mxu0
        %v1279 = vpop.f32.mrb[0].mxu0
        %1280 = vdwg.mxu0
        %v1282 = vsel %vm1229, %v1162, 0
        %1284 = vmatprep.subr.bf16.mxu0 %v1208
        %1285 = vmatpush1.bf16.msra.mxu0 %v1207
        %1286 = vmatprep.subr.bf16.mxu0 %v1210
        %1287 = vmatpush1.bf16.msra.mxu0 %v1209
        %1288 = vmatprep.subr.bf16.mxu0 %v1212
        %1289 = vmatpush1.bf16.msra.mxu0 %v1211
        %1290 = vmatprep.subr.bf16.mxu0 %v1214
        %1291 = vmatpush1.bf16.msra.mxu0 %v1213
        %1292 = vmatprep.subr.bf16.mxu0 %v1216
        %1293 = vmatpush1.bf16.msra.mxu0 %v1215
        %1294 = vmatprep.subr.bf16.mxu0 %v1238
        %1295 = vmatpush1.bf16.msra.mxu0 %v1235
        %1296 = vmatprep.subr.bf16.mxu0 0
        %1297 = vmatpush1.bf16.msra.mxu0 0
        %1298 = vmatprep.subr.bf16.mxu0 0
        %1299 = vmatpush1.bf16.msra.mxu0 0
        %1300 = vmatprep.subr.bf16.mxu0 0
        %1301 = vmatpush1.bf16.msra.mxu0 0
        %1302 = vmatprep.subr.bf16.mxu0 0
        %1303 = vmatpush1.bf16.msra.mxu0 0
        %1304 = vmatprep.subr.bf16.mxu0 0
        %1305 = vmatpush1.bf16.msra.mxu0 0
        %1306 = vmatprep.subr.bf16.mxu0 0
        %1307 = vmatpush1.bf16.msra.mxu0 0
        %1308 = vmatprep.subr.bf16.mxu0 0
        %1309 = vmatpush1.bf16.msra.mxu0 0
        %1310 = vmatprep.subr.bf16.mxu0 0
        %1311 = vmatpush1.bf16.msra.mxu0 0
        %1312 = vmatprep.subr.bf16.mxu0 0
        %1313 = vmatpush1.bf16.msra.mxu0 0
        %1314 = vmatprep.subr.bf16.mxu0 0
        %1315 = vmatpush1.bf16.msra.mxu0 0
        %1316 = vmatprep.mubr.bf16.mxu0 0
        %1317 = vmatmul.mubr.bf16.gmra.mrb[0].mxu0 %v1282
        %v1318 = vpop.f32.mrb[0].mxu0
        %v1319 = vadd.f32 0.0, %v1318
        %v1320 = vpop.f32.mrb[0].mxu0
        %v1321 = vadd.f32 0.0, %v1320
        %v1322 = vpop.f32.mrb[0].mxu0
        %v1323 = vpop.f32.mrb[0].mxu0
        %1324 = vdwg.mxu0
        %s1325 = scalar_lea.vmem %s3, 88
        %v1326 = vld [vmem:[%s1325] sm:$0xff]
        %v1327 = vld [vmem:[%s1325 + $0x8] sm:$0xff]
        %v1328 = vld [vmem:[%s1325 + $0x10] sm:$0xff]
        %v1329 = vld [vmem:[%s1325 + $0x18] sm:$0xff]
        %v1330 = vld [vmem:[%s1325 + $0x20] sm:$0xff]
        %v1331 = vld [vmem:[%s1325 + $0x28] sm:$0xff]
        %v1332 = vld [vmem:[%s1325 + $0x30] sm:$0xff]
        %v1333 = vld [vmem:[%s1325 + $0x38] sm:$0xff]
        %v1334 = vld [vmem:[%s1325 + $0x40] sm:$0xff]
        %v1335 = vld [vmem:[%s1325 + $0x48] sm:$0xff]
        %v1336 = vld [vmem:[%s1325 + $0x50] sm:$0x33]
        %v1348 = vunpack.c.l.b16 %v1326
        %v1349 = vunpack.c.h.b16 %v1326
        %v1350 = vunpack.c.l.b16 %v1327
        %v1351 = vunpack.c.h.b16 %v1327
        %v1352 = vunpack.c.l.b16 %v1328
        %v1353 = vunpack.c.h.b16 %v1328
        %v1354 = vunpack.c.l.b16 %v1329
        %v1355 = vunpack.c.h.b16 %v1329
        %v1356 = vunpack.c.l.b16 %v1330
        %v1357 = vunpack.c.h.b16 %v1330
        %v1358 = vunpack.c.l.b16 %v1331
        %v1359 = vunpack.c.h.b16 %v1331
        %v1360 = vunpack.c.l.b16 %v1332
        %v1361 = vunpack.c.h.b16 %v1332
        %v1362 = vunpack.c.l.b16 %v1333
        %v1363 = vunpack.c.h.b16 %v1333
        %v1364 = vunpack.c.l.b16 %v1334
        %v1365 = vunpack.c.h.b16 %v1334
        %v1366 = vunpack.c.l.b16 %v1335
        %v1367 = vunpack.c.h.b16 %v1335
        %v1368 = vunpack.c.l.b16 %v1336
        %v1369 = vunpack.c.h.b16 %v1336
        %v1370 = vpack.c.b16 %v1350, %v1348
        %v1371 = vpack.c.b16 %v1351, %v1349
        %v1372 = vpack.c.b16 %v1354, %v1352
        %v1373 = vpack.c.b16 %v1355, %v1353
        %v1374 = vpack.c.b16 %v1358, %v1356
        %v1375 = vpack.c.b16 %v1359, %v1357
        %v1376 = vpack.c.b16 %v1362, %v1360
        %v1377 = vpack.c.b16 %v1363, %v1361
        %v1378 = vpack.c.b16 %v1366, %v1364
        %v1379 = vpack.c.b16 %v1367, %v1365
        %v1380 = vpack.c.b16 %v1368, %v1368
        %v1381 = vpack.c.b16 %v1369, %v1369
        %v1393 = vsel %vm1233, %v1380, 0
        %v1396 = vsel %vm1233, %v1381, 0
        %1398 = vmatprep.subr.bf16.mxu0 %v1371
        %1399 = vmatpush1.bf16.msra.mxu0 %v1370
        %1400 = vmatprep.subr.bf16.mxu0 %v1373
        %1401 = vmatpush1.bf16.msra.mxu0 %v1372
        %1402 = vmatprep.subr.bf16.mxu0 %v1375
        %1403 = vmatpush1.bf16.msra.mxu0 %v1374
        %1404 = vmatprep.subr.bf16.mxu0 %v1377
        %1405 = vmatpush1.bf16.msra.mxu0 %v1376
        %1406 = vmatprep.subr.bf16.mxu0 %v1379
        %1407 = vmatpush1.bf16.msra.mxu0 %v1378
        %1408 = vmatprep.subr.bf16.mxu0 %v1396
        %1409 = vmatpush1.bf16.msra.mxu0 %v1393
        %1410 = vmatprep.subr.bf16.mxu0 0
        %1411 = vmatpush1.bf16.msra.mxu0 0
        %1412 = vmatprep.subr.bf16.mxu0 0
        %1413 = vmatpush1.bf16.msra.mxu0 0
        %1414 = vmatprep.subr.bf16.mxu0 0
        %1415 = vmatpush1.bf16.msra.mxu0 0
        %1416 = vmatprep.subr.bf16.mxu0 0
        %1417 = vmatpush1.bf16.msra.mxu0 0
        %1418 = vmatprep.subr.bf16.mxu0 0
        %1419 = vmatpush1.bf16.msra.mxu0 0
        %1420 = vmatprep.subr.bf16.mxu0 0
        %1421 = vmatpush1.bf16.msra.mxu0 0
        %1422 = vmatprep.subr.bf16.mxu0 0
        %1423 = vmatpush1.bf16.msra.mxu0 0
        %1424 = vmatprep.subr.bf16.mxu0 0
        %1425 = vmatpush1.bf16.msra.mxu0 0
        %1426 = vmatprep.subr.bf16.mxu0 0
        %1427 = vmatpush1.bf16.msra.mxu0 0
        %1428 = vmatprep.subr.bf16.mxu0 0
        %1429 = vmatpush1.bf16.msra.mxu0 0
        %1430 = vmatprep.mubr.bf16.mxu0 0
        %1431 = vmatmul.mubr.bf16.gmra.mrb[0].mxu0 %v1231
        %v1432 = vpop.f32.mrb[0].mxu0
        %v1433 = vadd.f32 0.0, %v1432
        %v1434 = vpop.f32.mrb[0].mxu0
        %v1435 = vadd.f32 0.0, %v1434
        %v1436 = vpop.f32.mrb[0].mxu0
        %v1437 = vpop.f32.mrb[0].mxu0
        %1438 = vdwg.mxu0
        %1439 = vmatprep.subr.bf16.mxu0 %v1371
        %1440 = vmatpush1.bf16.msra.mxu0 %v1370
        %1441 = vmatprep.subr.bf16.mxu0 %v1373
        %1442 = vmatpush1.bf16.msra.mxu0 %v1372
        %1443 = vmatprep.subr.bf16.mxu0 %v1375
        %1444 = vmatpush1.bf16.msra.mxu0 %v1374
        %1445 = vmatprep.subr.bf16.mxu0 %v1377
        %1446 = vmatpush1.bf16.msra.mxu0 %v1376
        %1447 = vmatprep.subr.bf16.mxu0 %v1379
        %1448 = vmatpush1.bf16.msra.mxu0 %v1378
        %1449 = vmatprep.subr.bf16.mxu0 %v1396
        %1450 = vmatpush1.bf16.msra.mxu0 %v1393
        %1451 = vmatprep.subr.bf16.mxu0 0
        %1452 = vmatpush1.bf16.msra.mxu0 0
        %1453 = vmatprep.subr.bf16.mxu0 0
        %1454 = vmatpush1.bf16.msra.mxu0 0
        %1455 = vmatprep.subr.bf16.mxu0 0
        %1456 = vmatpush1.bf16.msra.mxu0 0
        %1457 = vmatprep.subr.bf16.mxu0 0
        %1458 = vmatpush1.bf16.msra.mxu0 0
        %1459 = vmatprep.subr.bf16.mxu0 0
        %1460 = vmatpush1.bf16.msra.mxu0 0
        %1461 = vmatprep.subr.bf16.mxu0 0
        %1462 = vmatpush1.bf16.msra.mxu0 0
        %1463 = vmatprep.subr.bf16.mxu0 0
        %1464 = vmatpush1.bf16.msra.mxu0 0
        %1465 = vmatprep.subr.bf16.mxu0 0
        %1466 = vmatpush1.bf16.msra.mxu0 0
        %1467 = vmatprep.subr.bf16.mxu0 0
        %1468 = vmatpush1.bf16.msra.mxu0 0
        %1469 = vmatprep.subr.bf16.mxu0 0
        %1470 = vmatpush1.bf16.msra.mxu0 0
        %1471 = vmatprep.mubr.bf16.mxu0 0
        %1472 = vmatmul.mubr.bf16.gmra.mrb[0].mxu0 %v1282
        %v1473 = vpop.f32.mrb[0].mxu0
        %v1474 = vadd.f32 0.0, %v1473
        %v1475 = vpop.f32.mrb[0].mxu0
        %v1476 = vadd.f32 0.0, %v1475
        %v1477 = vpop.f32.mrb[0].mxu0
        %v1478 = vpop.f32.mrb[0].mxu0
        %1479 = vdwg.mxu0
        %v1480 = vadd.f32 %v1275, %v1474
        %v1481 = vadd.f32 %v1277, %v1476
        %v1484 = vrot.slane %v1433, 1
        %v1485 = vrot.slane %v1435, 1
        %v1488 = vadd.f32 %v1319, %v1484
        %v1489 = vadd.f32 %v1321, %v1485
        %s1490 = scalar_lea.vmem %s3, 176
        %v1491 = vld [vmem:[%s1490] sm:$0xff]
        %v1492 = vld [vmem:[%s1490 + $0x8] sm:$0xff]
        %v1493 = vld [vmem:[%s1490 + $0x10] sm:$0xff]
        %v1494 = vld [vmem:[%s1490 + $0x18] sm:$0xff]
        %v1495 = vld [vmem:[%s1490 + $0x20] sm:$0xff]
        %v1496 = vld [vmem:[%s1490 + $0x28] sm:$0xff]
        %v1497 = vld [vmem:[%s1490 + $0x30] sm:$0xff]
        %v1498 = vld [vmem:[%s1490 + $0x38] sm:$0xff]
        %v1499 = vld [vmem:[%s1490 + $0x40] sm:$0xff]
        %v1500 = vld [vmem:[%s1490 + $0x48] sm:$0xff]
        %v1501 = vld [vmem:[%s1490 + $0x50] sm:$0x33]
        %v1513 = vunpack.c.l.b16 %v1491
        %v1514 = vunpack.c.h.b16 %v1491
        %v1515 = vunpack.c.l.b16 %v1492
        %v1516 = vunpack.c.h.b16 %v1492
        %v1517 = vunpack.c.l.b16 %v1493
        %v1518 = vunpack.c.h.b16 %v1493
        %v1519 = vunpack.c.l.b16 %v1494
        %v1520 = vunpack.c.h.b16 %v1494
        %v1521 = vunpack.c.l.b16 %v1495
        %v1522 = vunpack.c.h.b16 %v1495
        %v1523 = vunpack.c.l.b16 %v1496
        %v1524 = vunpack.c.h.b16 %v1496
        %v1525 = vunpack.c.l.b16 %v1497
        %v1526 = vunpack.c.h.b16 %v1497
        %v1527 = vunpack.c.l.b16 %v1498
        %v1528 = vunpack.c.h.b16 %v1498
        %v1529 = vunpack.c.l.b16 %v1499
        %v1530 = vunpack.c.h.b16 %v1499
        %v1531 = vunpack.c.l.b16 %v1500
        %v1532 = vunpack.c.h.b16 %v1500
        %v1533 = vunpack.c.l.b16 %v1501
        %v1534 = vunpack.c.h.b16 %v1501
        %v1535 = vpack.c.b16 %v1515, %v1513
        %v1536 = vpack.c.b16 %v1516, %v1514
        %v1537 = vpack.c.b16 %v1519, %v1517
        %v1538 = vpack.c.b16 %v1520, %v1518
        %v1539 = vpack.c.b16 %v1523, %v1521
        %v1540 = vpack.c.b16 %v1524, %v1522
        %v1541 = vpack.c.b16 %v1527, %v1525
        %v1542 = vpack.c.b16 %v1528, %v1526
        %v1543 = vpack.c.b16 %v1531, %v1529
        %v1544 = vpack.c.b16 %v1532, %v1530
        %v1545 = vpack.c.b16 %v1533, %v1533
        %v1546 = vpack.c.b16 %v1534, %v1534
        %v1558 = vsel %vm1233, %v1545, 0
        %v1561 = vsel %vm1233, %v1546, 0
        %1563 = vmatprep.subr.bf16.mxu0 %v1536
        %1564 = vmatpush1.bf16.msra.mxu0 %v1535
        %1565 = vmatprep.subr.bf16.mxu0 %v1538
        %1566 = vmatpush1.bf16.msra.mxu0 %v1537
        %1567 = vmatprep.subr.bf16.mxu0 %v1540
        %1568 = vmatpush1.bf16.msra.mxu0 %v1539
        %1569 = vmatprep.subr.bf16.mxu0 %v1542
        %1570 = vmatpush1.bf16.msra.mxu0 %v1541
        %1571 = vmatprep.subr.bf16.mxu0 %v1544
        %1572 = vmatpush1.bf16.msra.mxu0 %v1543
        %1573 = vmatprep.subr.bf16.mxu0 %v1561
        %1574 = vmatpush1.bf16.msra.mxu0 %v1558
        %1575 = vmatprep.subr.bf16.mxu0 0
        %1576 = vmatpush1.bf16.msra.mxu0 0
        %1577 = vmatprep.subr.bf16.mxu0 0
        %1578 = vmatpush1.bf16.msra.mxu0 0
        %1579 = vmatprep.subr.bf16.mxu0 0
        %1580 = vmatpush1.bf16.msra.mxu0 0
        %1581 = vmatprep.subr.bf16.mxu0 0
        %1582 = vmatpush1.bf16.msra.mxu0 0
        %1583 = vmatprep.subr.bf16.mxu0 0
        %1584 = vmatpush1.bf16.msra.mxu0 0
        %1585 = vmatprep.subr.bf16.mxu0 0
        %1586 = vmatpush1.bf16.msra.mxu0 0
        %1587 = vmatprep.subr.bf16.mxu0 0
        %1588 = vmatpush1.bf16.msra.mxu0 0
        %1589 = vmatprep.subr.bf16.mxu0 0
        %1590 = vmatpush1.bf16.msra.mxu0 0
        %1591 = vmatprep.subr.bf16.mxu0 0
        %1592 = vmatpush1.bf16.msra.mxu0 0
        %1593 = vmatprep.subr.bf16.mxu0 0
        %1594 = vmatpush1.bf16.msra.mxu0 0
        %1595 = vmatprep.mubr.bf16.mxu0 0
        %1596 = vmatmul.mubr.bf16.gmra.mrb[0].mxu0 %v1231
        %v1597 = vpop.f32.mrb[0].mxu0
        %v1598 = vadd.f32 0.0, %v1597
        %v1599 = vpop.f32.mrb[0].mxu0
        %v1600 = vadd.f32 0.0, %v1599
        %v1601 = vpop.f32.mrb[0].mxu0
        %v1602 = vpop.f32.mrb[0].mxu0
        %1603 = vdwg.mxu0
        %1604 = vmatprep.subr.bf16.mxu0 %v1536
        %1605 = vmatpush1.bf16.msra.mxu0 %v1535
        %1606 = vmatprep.subr.bf16.mxu0 %v1538
        %1607 = vmatpush1.bf16.msra.mxu0 %v1537
        %1608 = vmatprep.subr.bf16.mxu0 %v1540
        %1609 = vmatpush1.bf16.msra.mxu0 %v1539
        %1610 = vmatprep.subr.bf16.mxu0 %v1542
        %1611 = vmatpush1.bf16.msra.mxu0 %v1541
        %1612 = vmatprep.subr.bf16.mxu0 %v1544
        %1613 = vmatpush1.bf16.msra.mxu0 %v1543
        %1614 = vmatprep.subr.bf16.mxu0 %v1561
        %1615 = vmatpush1.bf16.msra.mxu0 %v1558
        %1616 = vmatprep.subr.bf16.mxu0 0
        %1617 = vmatpush1.bf16.msra.mxu0 0
        %1618 = vmatprep.subr.bf16.mxu0 0
        %1619 = vmatpush1.bf16.msra.mxu0 0
        %1620 = vmatprep.subr.bf16.mxu0 0
        %1621 = vmatpush1.bf16.msra.mxu0 0
        %1622 = vmatprep.subr.bf16.mxu0 0
        %1623 = vmatpush1.bf16.msra.mxu0 0
        %1624 = vmatprep.subr.bf16.mxu0 0
        %1625 = vmatpush1.bf16.msra.mxu0 0
        %1626 = vmatprep.subr.bf16.mxu0 0
        %1627 = vmatpush1.bf16.msra.mxu0 0
        %1628 = vmatprep.subr.bf16.mxu0 0
        %1629 = vmatpush1.bf16.msra.mxu0 0
        %1630 = vmatprep.subr.bf16.mxu0 0
        %1631 = vmatpush1.bf16.msra.mxu0 0
        %1632 = vmatprep.subr.bf16.mxu0 0
        %1633 = vmatpush1.bf16.msra.mxu0 0
        %1634 = vmatprep.subr.bf16.mxu0 0
        %1635 = vmatpush1.bf16.msra.mxu0 0
        %1636 = vmatprep.mubr.bf16.mxu0 0
        %1637 = vmatmul.mubr.bf16.gmra.mrb[0].mxu0 %v1282
        %v1638 = vpop.f32.mrb[0].mxu0
        %v1639 = vadd.f32 0.0, %v1638
        %v1640 = vpop.f32.mrb[0].mxu0
        %v1641 = vadd.f32 0.0, %v1640
        %v1642 = vpop.f32.mrb[0].mxu0
        %v1643 = vpop.f32.mrb[0].mxu0
        %1644 = vdwg.mxu0
        %v1647 = vrot.slane %v1598, 1
        %v1648 = vrot.slane %v1600, 1
        %v1651 = vadd.f32 %v1480, %v1647
        %v1652 = vadd.f32 %v1481, %v1648
        %v1655 = vrot.slane %v1639, 1
        %v1656 = vrot.slane %v1641, 1
        %v1659 = vadd.f32 %v1488, %v1655
        %v1660 = vadd.f32 %v1489, %v1656
        %s1661 = scalar_lea.vmem %s3, 264
        %v1662 = vld [vmem:[%s1661] sm:$0xff]
        %v1663 = vld [vmem:[%s1661 + $0x8] sm:$0xff]
        %v1664 = vld [vmem:[%s1661 + $0x10] sm:$0xff]
        %v1665 = vld [vmem:[%s1661 + $0x18] sm:$0xff]
        %v1666 = vld [vmem:[%s1661 + $0x20] sm:$0xff]
        %v1667 = vld [vmem:[%s1661 + $0x28] sm:$0xff]
        %v1668 = vld [vmem:[%s1661 + $0x30] sm:$0xff]
        %v1669 = vld [vmem:[%s1661 + $0x38] sm:$0xff]
        %v1670 = vld [vmem:[%s1661 + $0x40] sm:$0xff]
        %v1671 = vld [vmem:[%s1661 + $0x48] sm:$0xff]
        %v1672 = vld [vmem:[%s1661 + $0x50] sm:$0x33]
        %v1684 = vunpack.c.l.b16 %v1662
        %v1685 = vunpack.c.h.b16 %v1662
        %v1686 = vunpack.c.l.b16 %v1663
        %v1687 = vunpack.c.h.b16 %v1663
        %v1688 = vunpack.c.l.b16 %v1664
        %v1689 = vunpack.c.h.b16 %v1664
        %v1690 = vunpack.c.l.b16 %v1665
        %v1691 = vunpack.c.h.b16 %v1665
        %v1692 = vunpack.c.l.b16 %v1666
        %v1693 = vunpack.c.h.b16 %v1666
        %v1694 = vunpack.c.l.b16 %v1667
        %v1695 = vunpack.c.h.b16 %v1667
        %v1696 = vunpack.c.l.b16 %v1668
        %v1697 = vunpack.c.h.b16 %v1668
        %v1698 = vunpack.c.l.b16 %v1669
        %v1699 = vunpack.c.h.b16 %v1669
        %v1700 = vunpack.c.l.b16 %v1670
        %v1701 = vunpack.c.h.b16 %v1670
        %v1702 = vunpack.c.l.b16 %v1671
        %v1703 = vunpack.c.h.b16 %v1671
        %v1704 = vunpack.c.l.b16 %v1672
        %v1705 = vunpack.c.h.b16 %v1672
        %v1706 = vpack.c.b16 %v1686, %v1684
        %v1707 = vpack.c.b16 %v1687, %v1685
        %v1708 = vpack.c.b16 %v1690, %v1688
        %v1709 = vpack.c.b16 %v1691, %v1689
        %v1710 = vpack.c.b16 %v1694, %v1692
        %v1711 = vpack.c.b16 %v1695, %v1693
        %v1712 = vpack.c.b16 %v1698, %v1696
        %v1713 = vpack.c.b16 %v1699, %v1697
        %v1714 = vpack.c.b16 %v1702, %v1700
        %v1715 = vpack.c.b16 %v1703, %v1701
        %v1716 = vpack.c.b16 %v1704, %v1704
        %v1717 = vpack.c.b16 %v1705, %v1705
        %v1729 = vsel %vm1233, %v1716, 0
        %v1732 = vsel %vm1233, %v1717, 0
        %1734 = vmatprep.subr.bf16.mxu0 %v1707
        %1735 = vmatpush1.bf16.msra.mxu0 %v1706
        %1736 = vmatprep.subr.bf16.mxu0 %v1709
        %1737 = vmatpush1.bf16.msra.mxu0 %v1708
        %1738 = vmatprep.subr.bf16.mxu0 %v1711
        %1739 = vmatpush1.bf16.msra.mxu0 %v1710
        %1740 = vmatprep.subr.bf16.mxu0 %v1713
        %1741 = vmatpush1.bf16.msra.mxu0 %v1712
        %1742 = vmatprep.subr.bf16.mxu0 %v1715
        %1743 = vmatpush1.bf16.msra.mxu0 %v1714
        %1744 = vmatprep.subr.bf16.mxu0 %v1732
        %1745 = vmatpush1.bf16.msra.mxu0 %v1729
        %1746 = vmatprep.subr.bf16.mxu0 0
        %1747 = vmatpush1.bf16.msra.mxu0 0
        %1748 = vmatprep.subr.bf16.mxu0 0
        %1749 = vmatpush1.bf16.msra.mxu0 0
        %1750 = vmatprep.subr.bf16.mxu0 0
        %1751 = vmatpush1.bf16.msra.mxu0 0
        %1752 = vmatprep.subr.bf16.mxu0 0
        %1753 = vmatpush1.bf16.msra.mxu0 0
        %1754 = vmatprep.subr.bf16.mxu0 0
        %1755 = vmatpush1.bf16.msra.mxu0 0
        %1756 = vmatprep.subr.bf16.mxu0 0
        %1757 = vmatpush1.bf16.msra.mxu0 0
        %1758 = vmatprep.subr.bf16.mxu0 0
        %1759 = vmatpush1.bf16.msra.mxu0 0
        %1760 = vmatprep.subr.bf16.mxu0 0
        %1761 = vmatpush1.bf16.msra.mxu0 0
        %1762 = vmatprep.subr.bf16.mxu0 0
        %1763 = vmatpush1.bf16.msra.mxu0 0
        %1764 = vmatprep.subr.bf16.mxu0 0
        %1765 = vmatpush1.bf16.msra.mxu0 0
        %1766 = vmatprep.mubr.bf16.mxu0 0
        %1767 = vmatmul.mubr.bf16.gmra.mrb[0].mxu0 %v1231
        %v1768 = vpop.f32.mrb[0].mxu0
        %v1769 = vadd.f32 0.0, %v1768
        %v1770 = vpop.f32.mrb[0].mxu0
        %v1771 = vadd.f32 0.0, %v1770
        %v1772 = vpop.f32.mrb[0].mxu0
        %v1773 = vpop.f32.mrb[0].mxu0
        %1774 = vdwg.mxu0
        %1775 = vmatprep.subr.bf16.mxu0 %v1707
        %1776 = vmatpush1.bf16.msra.mxu0 %v1706
        %1777 = vmatprep.subr.bf16.mxu0 %v1709
        %1778 = vmatpush1.bf16.msra.mxu0 %v1708
        %1779 = vmatprep.subr.bf16.mxu0 %v1711
        %1780 = vmatpush1.bf16.msra.mxu0 %v1710
        %1781 = vmatprep.subr.bf16.mxu0 %v1713
        %1782 = vmatpush1.bf16.msra.mxu0 %v1712
        %1783 = vmatprep.subr.bf16.mxu0 %v1715
        %1784 = vmatpush1.bf16.msra.mxu0 %v1714
        %1785 = vmatprep.subr.bf16.mxu0 %v1732
        %1786 = vmatpush1.bf16.msra.mxu0 %v1729
        %1787 = vmatprep.subr.bf16.mxu0 0
        %1788 = vmatpush1.bf16.msra.mxu0 0
        %1789 = vmatprep.subr.bf16.mxu0 0
        %1790 = vmatpush1.bf16.msra.mxu0 0
        %1791 = vmatprep.subr.bf16.mxu0 0
        %1792 = vmatpush1.bf16.msra.mxu0 0
        %1793 = vmatprep.subr.bf16.mxu0 0
        %1794 = vmatpush1.bf16.msra.mxu0 0
        %1795 = vmatprep.subr.bf16.mxu0 0
        %1796 = vmatpush1.bf16.msra.mxu0 0
        %1797 = vmatprep.subr.bf16.mxu0 0
        %1798 = vmatpush1.bf16.msra.mxu0 0
        %1799 = vmatprep.subr.bf16.mxu0 0
        %1800 = vmatpush1.bf16.msra.mxu0 0
        %1801 = vmatprep.subr.bf16.mxu0 0
        %1802 = vmatpush1.bf16.msra.mxu0 0
        %1803 = vmatprep.subr.bf16.mxu0 0
        %1804 = vmatpush1.bf16.msra.mxu0 0
        %1805 = vmatprep.subr.bf16.mxu0 0
        %1806 = vmatpush1.bf16.msra.mxu0 0
        %1807 = vmatprep.mubr.bf16.mxu0 0
        %1808 = vmatmul.mubr.bf16.gmra.mrb[0].mxu0 %v1282
        %v1809 = vpop.f32.mrb[0].mxu0
        %v1810 = vadd.f32 0.0, %v1809
        %v1811 = vpop.f32.mrb[0].mxu0
        %v1812 = vadd.f32 0.0, %v1811
        %v1813 = vpop.f32.mrb[0].mxu0
        %v1814 = vpop.f32.mrb[0].mxu0
        %1815 = vdwg.mxu0
        %v1818 = vrot.slane %v1810, 1
        %v1819 = vrot.slane %v1812, 1
        %v1822 = vadd.f32 %v1651, %v1818
        %v1823 = vadd.f32 %v1652, %v1819
        %v1826 = vrot.slane %v1769, 2
        %v1827 = vrot.slane %v1771, 2
        %v1830 = vadd.f32 %v1659, %v1826
        %v1831 = vadd.f32 %v1660, %v1827
        %s1832 = scalar_lea.vmem %s3, 352
        %v1833 = vld [vmem:[%s1832] sm:$0xff]
        %v1834 = vld [vmem:[%s1832 + $0x8] sm:$0xff]
        %v1835 = vld [vmem:[%s1832 + $0x10] sm:$0xff]
        %v1836 = vld [vmem:[%s1832 + $0x18] sm:$0xff]
        %v1837 = vld [vmem:[%s1832 + $0x20] sm:$0xff]
        %v1838 = vld [vmem:[%s1832 + $0x28] sm:$0xff]
        %v1839 = vld [vmem:[%s1832 + $0x30] sm:$0xff]
        %v1840 = vld [vmem:[%s1832 + $0x38] sm:$0xff]
        %v1841 = vld [vmem:[%s1832 + $0x40] sm:$0xff]
        %v1842 = vld [vmem:[%s1832 + $0x48] sm:$0xff]
        %v1843 = vld [vmem:[%s1832 + $0x50] sm:$0x33]
        %v1855 = vunpack.c.l.b16 %v1833
        %v1856 = vunpack.c.h.b16 %v1833
        %v1857 = vunpack.c.l.b16 %v1834
        %v1858 = vunpack.c.h.b16 %v1834
        %v1859 = vunpack.c.l.b16 %v1835
        %v1860 = vunpack.c.h.b16 %v1835
        %v1861 = vunpack.c.l.b16 %v1836
        %v1862 = vunpack.c.h.b16 %v1836
        %v1863 = vunpack.c.l.b16 %v1837
        %v1864 = vunpack.c.h.b16 %v1837
        %v1865 = vunpack.c.l.b16 %v1838
        %v1866 = vunpack.c.h.b16 %v1838
        %v1867 = vunpack.c.l.b16 %v1839
        %v1868 = vunpack.c.h.b16 %v1839
        %v1869 = vunpack.c.l.b16 %v1840
        %v1870 = vunpack.c.h.b16 %v1840
        %v1871 = vunpack.c.l.b16 %v1841
        %v1872 = vunpack.c.h.b16 %v1841
        %v1873 = vunpack.c.l.b16 %v1842
        %v1874 = vunpack.c.h.b16 %v1842
        %v1875 = vunpack.c.l.b16 %v1843
        %v1876 = vunpack.c.h.b16 %v1843
        %v1877 = vpack.c.b16 %v1857, %v1855
        %v1878 = vpack.c.b16 %v1858, %v1856
        %v1879 = vpack.c.b16 %v1861, %v1859
        %v1880 = vpack.c.b16 %v1862, %v1860
        %v1881 = vpack.c.b16 %v1865, %v1863
        %v1882 = vpack.c.b16 %v1866, %v1864
        %v1883 = vpack.c.b16 %v1869, %v1867
        %v1884 = vpack.c.b16 %v1870, %v1868
        %v1885 = vpack.c.b16 %v1873, %v1871
        %v1886 = vpack.c.b16 %v1874, %v1872
        %v1887 = vpack.c.b16 %v1875, %v1875
        %v1888 = vpack.c.b16 %v1876, %v1876
        %v1900 = vsel %vm1233, %v1887, 0
        %v1903 = vsel %vm1233, %v1888, 0
        %1905 = vmatprep.subr.bf16.mxu0 %v1878
        %1906 = vmatpush1.bf16.msra.mxu0 %v1877
        %1907 = vmatprep.subr.bf16.mxu0 %v1880
        %1908 = vmatpush1.bf16.msra.mxu0 %v1879
        %1909 = vmatprep.subr.bf16.mxu0 %v1882
        %1910 = vmatpush1.bf16.msra.mxu0 %v1881
        %1911 = vmatprep.subr.bf16.mxu0 %v1884
        %1912 = vmatpush1.bf16.msra.mxu0 %v1883
        %1913 = vmatprep.subr.bf16.mxu0 %v1886
        %1914 = vmatpush1.bf16.msra.mxu0 %v1885
        %1915 = vmatprep.subr.bf16.mxu0 %v1903
        %1916 = vmatpush1.bf16.msra.mxu0 %v1900
        %1917 = vmatprep.subr.bf16.mxu0 0
        %1918 = vmatpush1.bf16.msra.mxu0 0
        %1919 = vmatprep.subr.bf16.mxu0 0
        %1920 = vmatpush1.bf16.msra.mxu0 0
        %1921 = vmatprep.subr.bf16.mxu0 0
        %1922 = vmatpush1.bf16.msra.mxu0 0
        %1923 = vmatprep.subr.bf16.mxu0 0
        %1924 = vmatpush1.bf16.msra.mxu0 0
        %1925 = vmatprep.subr.bf16.mxu0 0
        %1926 = vmatpush1.bf16.msra.mxu0 0
        %1927 = vmatprep.subr.bf16.mxu0 0
        %1928 = vmatpush1.bf16.msra.mxu0 0
        %1929 = vmatprep.subr.bf16.mxu0 0
        %1930 = vmatpush1.bf16.msra.mxu0 0
        %1931 = vmatprep.subr.bf16.mxu0 0
        %1932 = vmatpush1.bf16.msra.mxu0 0
        %1933 = vmatprep.subr.bf16.mxu0 0
        %1934 = vmatpush1.bf16.msra.mxu0 0
        %1935 = vmatprep.subr.bf16.mxu0 0
        %1936 = vmatpush1.bf16.msra.mxu0 0
        %1937 = vmatprep.mubr.bf16.mxu0 0
        %1938 = vmatmul.mubr.bf16.gmra.mrb[0].mxu0 %v1231
        %v1939 = vpop.f32.mrb[0].mxu0
        %v1940 = vadd.f32 0.0, %v1939
        %v1941 = vpop.f32.mrb[0].mxu0
        %v1942 = vadd.f32 0.0, %v1941
        %v1943 = vpop.f32.mrb[0].mxu0
        %v1944 = vpop.f32.mrb[0].mxu0
        %1945 = vdwg.mxu0
        %1946 = vmatprep.subr.bf16.mxu0 %v1878
        %1947 = vmatpush1.bf16.msra.mxu0 %v1877
        %1948 = vmatprep.subr.bf16.mxu0 %v1880
        %1949 = vmatpush1.bf16.msra.mxu0 %v1879
        %1950 = vmatprep.subr.bf16.mxu0 %v1882
        %1951 = vmatpush1.bf16.msra.mxu0 %v1881
        %1952 = vmatprep.subr.bf16.mxu0 %v1884
        %1953 = vmatpush1.bf16.msra.mxu0 %v1883
        %1954 = vmatprep.subr.bf16.mxu0 %v1886
        %1955 = vmatpush1.bf16.msra.mxu0 %v1885
        %1956 = vmatprep.subr.bf16.mxu0 %v1903
        %1957 = vmatpush1.bf16.msra.mxu0 %v1900
        %1958 = vmatprep.subr.bf16.mxu0 0
        %1959 = vmatpush1.bf16.msra.mxu0 0
        %1960 = vmatprep.subr.bf16.mxu0 0
        %1961 = vmatpush1.bf16.msra.mxu0 0
        %1962 = vmatprep.subr.bf16.mxu0 0
        %1963 = vmatpush1.bf16.msra.mxu0 0
        %1964 = vmatprep.subr.bf16.mxu0 0
        %1965 = vmatpush1.bf16.msra.mxu0 0
        %1966 = vmatprep.subr.bf16.mxu0 0
        %1967 = vmatpush1.bf16.msra.mxu0 0
        %1968 = vmatprep.subr.bf16.mxu0 0
        %1969 = vmatpush1.bf16.msra.mxu0 0
        %1970 = vmatprep.subr.bf16.mxu0 0
        %1971 = vmatpush1.bf16.msra.mxu0 0
        %1972 = vmatprep.subr.bf16.mxu0 0
        %1973 = vmatpush1.bf16.msra.mxu0 0
        %1974 = vmatprep.subr.bf16.mxu0 0
        %1975 = vmatpush1.bf16.msra.mxu0 0
        %1976 = vmatprep.subr.bf16.mxu0 0
        %1977 = vmatpush1.bf16.msra.mxu0 0
        %1978 = vmatprep.mubr.bf16.mxu0 0
        %1979 = vmatmul.mubr.bf16.gmra.mrb[0].mxu0 %v1282
        %v1980 = vpop.f32.mrb[0].mxu0
        %v1981 = vadd.f32 0.0, %v1980
        %v1982 = vpop.f32.mrb[0].mxu0
        %v1983 = vadd.f32 0.0, %v1982
        %v1984 = vpop.f32.mrb[0].mxu0
        %v1985 = vpop.f32.mrb[0].mxu0
        %1986 = vdwg.mxu0
        %v1989 = vrot.slane %v1940, 2
        %v1990 = vrot.slane %v1942, 2
        %v1993 = vadd.f32 %v1822, %v1989
        %v1994 = vadd.f32 %v1823, %v1990
        %v1997 = vrot.slane %v1981, 2
        %v1998 = vrot.slane %v1983, 2
        %v2001 = vadd.f32 %v1830, %v1997
        %v2002 = vadd.f32 %v1831, %v1998
        %v2003 = vmax.f32 %v1993, %v2001
        %v2004 = vmax.f32 %v1994, %v2002
        %2007 = vrot.lane.b32.xlu0 %v2003, 48
        %v2008 = vpop.permute.xlu0 %2007
        %2009 = vrot.lane.b32.xlu0 %v2004, 48
        %v2010 = vpop.permute.xlu0 %2009
        %vm2011 = vcmask 392192
        %v2012 = vsel %vm2011, %v2008, %v2010
        %v2014 = vmax.f32 %v2003, %v2012
        %v2015 = vld [vmem:[%s4] sm:$0x1]
        %v2017 = vlaneseq
        %v2018 = vshrl.u32 %v2017, 7
        %v2019 = vsub.s32 0, %v2018
        %v2020 = vrot.slane %v2015, %v2019
        %v2022 = vadd.f32 %v2014, %v2020
        %v2023 = vmax.f32 %v2022, 0.0
        %v2024 = vpack.c.bf16 %v2023, %v2023
        %v2025 = vld [vmem:[%s6] sm:$0x1]
        %v2026 = vld [vmem:[%s5] sm:$0xf]
        %v2027 = vld [vmem:[%s5 + $0x4] sm:$0xf]
        %v2028 = vld [vmem:[%s5 + $0x8] sm:$0xf]
        %v2029 = vld [vmem:[%s5 + $0xc] sm:$0xf]
        %v2030 = vld [vmem:[%s5 + $0x10] sm:$0xf]
        %v2031 = vld [vmem:[%s5 + $0x14] sm:$0xf]
        %v2032 = vld [vmem:[%s5 + $0x18] sm:$0xf]
        %v2033 = vld [vmem:[%s5 + $0x1c] sm:$0xf]
        %v2034 = vld [vmem:[%s5 + $0x20] sm:$0xf]
        %v2035 = vld [vmem:[%s5 + $0x24] sm:$0xf]
        %v2046 = vunpack.c.l.b16 %v2026
        %v2047 = vunpack.c.l.b16 %v2027
        %v2048 = vunpack.c.l.b16 %v2028
        %v2049 = vunpack.c.l.b16 %v2029
        %v2050 = vunpack.c.l.b16 %v2030
        %v2051 = vunpack.c.l.b16 %v2031
        %v2052 = vunpack.c.l.b16 %v2032
        %v2053 = vunpack.c.l.b16 %v2033
        %v2054 = vunpack.c.l.b16 %v2034
        %v2055 = vunpack.c.l.b16 %v2035
        %v2056 = vpack.c.b16 %v2047, %v2046
        %v2057 = vpack.c.b16 %v2049, %v2048
        %v2058 = vpack.c.b16 %v2051, %v2050
        %v2059 = vpack.c.b16 %v2053, %v2052
        %v2060 = vpack.c.b16 %v2055, %v2054
        %vm2066 = vcmask 654336
        %v2068 = vsel %vm2066, %v2024, 0
        %2070 = vmatprep.subr.bf16.mxu0 0
        %2071 = vmatpush1.bf16.msra.mxu0 %v2056
        %2072 = vmatprep.subr.bf16.mxu0 0
        %2073 = vmatpush1.bf16.msra.mxu0 %v2057
        %2074 = vmatprep.subr.bf16.mxu0 0
        %2075 = vmatpush1.bf16.msra.mxu0 %v2058
        %2076 = vmatprep.subr.bf16.mxu0 0
        %2077 = vmatpush1.bf16.msra.mxu0 %v2059
        %2078 = vmatprep.subr.bf16.mxu0 0
        %2079 = vmatpush1.bf16.msra.mxu0 %v2060
        %2080 = vmatprep.subr.bf16.mxu0 0
        %2081 = vmatpush1.bf16.msra.mxu0 0
        %2082 = vmatprep.subr.bf16.mxu0 0
        %2083 = vmatpush1.bf16.msra.mxu0 0
        %2084 = vmatprep.subr.bf16.mxu0 0
        %2085 = vmatpush1.bf16.msra.mxu0 0
        %2086 = vmatprep.subr.bf16.mxu0 0
        %2087 = vmatpush1.bf16.msra.mxu0 0
        %2088 = vmatprep.subr.bf16.mxu0 0
        %2089 = vmatpush1.bf16.msra.mxu0 0
        %2090 = vmatprep.subr.bf16.mxu0 0
        %2091 = vmatpush1.bf16.msra.mxu0 0
        %2092 = vmatprep.subr.bf16.mxu0 0
        %2093 = vmatpush1.bf16.msra.mxu0 0
        %2094 = vmatprep.subr.bf16.mxu0 0
        %2095 = vmatpush1.bf16.msra.mxu0 0
        %2096 = vmatprep.subr.bf16.mxu0 0
        %2097 = vmatpush1.bf16.msra.mxu0 0
        %2098 = vmatprep.subr.bf16.mxu0 0
        %2099 = vmatpush1.bf16.msra.mxu0 0
        %2100 = vmatprep.subr.bf16.mxu0 0
        %2101 = vmatpush1.bf16.msra.mxu0 0
        %2102 = vmatprep.mubr.bf16.mxu0 0
        %2103 = vmatmul.mubr.bf16.gmra.mrb[0].mxu0 %v2068
        %v2104 = vpop.f32.mrb[0].mxu0
        %v2105 = vadd.f32 0.0, %v2104
        %v2106 = vpop.f32.mrb[0].mxu0
        %v2107 = vpop.f32.mrb[0].mxu0
        %v2108 = vpop.f32.mrb[0].mxu0
        %2109 = vdwg.mxu0
        %v2110 = vadd.f32 %v2025, %v2105
        %s2111 = scalar_lea.vmem %s5, 40
        %v2112 = vld [vmem:[%s2111] sm:$0xf]
        %v2113 = vld [vmem:[%s2111 + $0x4] sm:$0xf]
        %v2114 = vld [vmem:[%s2111 + $0x8] sm:$0xf]
        %v2115 = vld [vmem:[%s2111 + $0xc] sm:$0xf]
        %v2116 = vld [vmem:[%s2111 + $0x10] sm:$0xf]
        %v2117 = vld [vmem:[%s2111 + $0x14] sm:$0xf]
        %v2118 = vld [vmem:[%s2111 + $0x18] sm:$0xf]
        %v2119 = vld [vmem:[%s2111 + $0x1c] sm:$0xf]
        %v2120 = vld [vmem:[%s2111 + $0x20] sm:$0xf]
        %v2121 = vld [vmem:[%s2111 + $0x24] sm:$0xf]
        %v2122 = vshrl.u32 %v2024, 16
        %v2134 = vunpack.c.l.b16 %v2112
        %v2135 = vunpack.c.l.b16 %v2113
        %v2136 = vunpack.c.l.b16 %v2114
        %v2137 = vunpack.c.l.b16 %v2115
        %v2138 = vunpack.c.l.b16 %v2116
        %v2139 = vunpack.c.l.b16 %v2117
        %v2140 = vunpack.c.l.b16 %v2118
        %v2141 = vunpack.c.l.b16 %v2119
        %v2142 = vunpack.c.l.b16 %v2120
        %v2143 = vunpack.c.l.b16 %v2121
        %v2144 = vpack.c.b16 %v2135, %v2134
        %v2145 = vpack.c.b16 %v2137, %v2136
        %v2146 = vpack.c.b16 %v2139, %v2138
        %v2147 = vpack.c.b16 %v2141, %v2140
        %v2148 = vpack.c.b16 %v2143, %v2142
        %v2155 = vsel %vm2066, %v2122, 0
        %2157 = vmatprep.subr.bf16.mxu0 0
        %2158 = vmatpush1.bf16.msra.mxu0 %v2144
        %2159 = vmatprep.subr.bf16.mxu0 0
        %2160 = vmatpush1.bf16.msra.mxu0 %v2145
        %2161 = vmatprep.subr.bf16.mxu0 0
        %2162 = vmatpush1.bf16.msra.mxu0 %v2146
        %2163 = vmatprep.subr.bf16.mxu0 0
        %2164 = vmatpush1.bf16.msra.mxu0 %v2147
        %2165 = vmatprep.subr.bf16.mxu0 0
        %2166 = vmatpush1.bf16.msra.mxu0 %v2148
        %2167 = vmatprep.subr.bf16.mxu0 0
        %2168 = vmatpush1.bf16.msra.mxu0 0
        %2169 = vmatprep.subr.bf16.mxu0 0
        %2170 = vmatpush1.bf16.msra.mxu0 0
        %2171 = vmatprep.subr.bf16.mxu0 0
        %2172 = vmatpush1.bf16.msra.mxu0 0
        %2173 = vmatprep.subr.bf16.mxu0 0
        %2174 = vmatpush1.bf16.msra.mxu0 0
        %2175 = vmatprep.subr.bf16.mxu0 0
        %2176 = vmatpush1.bf16.msra.mxu0 0
        %2177 = vmatprep.subr.bf16.mxu0 0
        %2178 = vmatpush1.bf16.msra.mxu0 0
        %2179 = vmatprep.subr.bf16.mxu0 0
        %2180 = vmatpush1.bf16.msra.mxu0 0
        %2181 = vmatprep.subr.bf16.mxu0 0
        %2182 = vmatpush1.bf16.msra.mxu0 0
        %2183 = vmatprep.subr.bf16.mxu0 0
        %2184 = vmatpush1.bf16.msra.mxu0 0
        %2185 = vmatprep.subr.bf16.mxu0 0
        %2186 = vmatpush1.bf16.msra.mxu0 0
        %2187 = vmatprep.subr.bf16.mxu0 0
        %2188 = vmatpush1.bf16.msra.mxu0 0
        %2189 = vmatprep.mubr.bf16.mxu0 0
        %2190 = vmatmul.mubr.bf16.gmra.mrb[0].mxu0 %v2155
        %v2191 = vpop.f32.mrb[0].mxu0
        %v2192 = vadd.f32 0.0, %v2191
        %v2193 = vpop.f32.mrb[0].mxu0
        %v2194 = vpop.f32.mrb[0].mxu0
        %v2195 = vpop.f32.mrb[0].mxu0
        %2196 = vdwg.mxu0
        %v2197 = vadd.f32 %v2110, %v2192
        %s2198 = scalar_lea.vmem %s5, 80
        %v2199 = vld [vmem:[%s2198] sm:$0xf]
        %v2200 = vld [vmem:[%s2198 + $0x4] sm:$0xf]
        %v2201 = vld [vmem:[%s2198 + $0x8] sm:$0xf]
        %v2202 = vld [vmem:[%s2198 + $0xc] sm:$0xf]
        %v2203 = vld [vmem:[%s2198 + $0x10] sm:$0xf]
        %v2204 = vld [vmem:[%s2198 + $0x14] sm:$0xf]
        %v2205 = vld [vmem:[%s2198 + $0x18] sm:$0xf]
        %v2206 = vld [vmem:[%s2198 + $0x1c] sm:$0xf]
        %v2207 = vld [vmem:[%s2198 + $0x20] sm:$0xf]
        %v2208 = vld [vmem:[%s2198 + $0x24] sm:$0xf]
        %v2210 = vrot.slane %v2024, 1
        %v2221 = vunpack.c.l.b16 %v2199
        %v2222 = vunpack.c.l.b16 %v2200
        %v2223 = vunpack.c.l.b16 %v2201
        %v2224 = vunpack.c.l.b16 %v2202
        %v2225 = vunpack.c.l.b16 %v2203
        %v2226 = vunpack.c.l.b16 %v2204
        %v2227 = vunpack.c.l.b16 %v2205
        %v2228 = vunpack.c.l.b16 %v2206
        %v2229 = vunpack.c.l.b16 %v2207
        %v2230 = vunpack.c.l.b16 %v2208
        %v2231 = vpack.c.b16 %v2222, %v2221
        %v2232 = vpack.c.b16 %v2224, %v2223
        %v2233 = vpack.c.b16 %v2226, %v2225
        %v2234 = vpack.c.b16 %v2228, %v2227
        %v2235 = vpack.c.b16 %v2230, %v2229
        %v2242 = vsel %vm2066, %v2210, 0
        %2244 = vmatprep.subr.bf16.mxu0 0
        %2245 = vmatpush1.bf16.msra.mxu0 %v2231
        %2246 = vmatprep.subr.bf16.mxu0 0
        %2247 = vmatpush1.bf16.msra.mxu0 %v2232
        %2248 = vmatprep.subr.bf16.mxu0 0
        %2249 = vmatpush1.bf16.msra.mxu0 %v2233
        %2250 = vmatprep.subr.bf16.mxu0 0
        %2251 = vmatpush1.bf16.msra.mxu0 %v2234
        %2252 = vmatprep.subr.bf16.mxu0 0
        %2253 = vmatpush1.bf16.msra.mxu0 %v2235
        %2254 = vmatprep.subr.bf16.mxu0 0
        %2255 = vmatpush1.bf16.msra.mxu0 0
        %2256 = vmatprep.subr.bf16.mxu0 0
        %2257 = vmatpush1.bf16.msra.mxu0 0
        %2258 = vmatprep.subr.bf16.mxu0 0
        %2259 = vmatpush1.bf16.msra.mxu0 0
        %2260 = vmatprep.subr.bf16.mxu0 0
        %2261 = vmatpush1.bf16.msra.mxu0 0
        %2262 = vmatprep.subr.bf16.mxu0 0
        %2263 = vmatpush1.bf16.msra.mxu0 0
        %2264 = vmatprep.subr.bf16.mxu0 0
        %2265 = vmatpush1.bf16.msra.mxu0 0
        %2266 = vmatprep.subr.bf16.mxu0 0
        %2267 = vmatpush1.bf16.msra.mxu0 0
        %2268 = vmatprep.subr.bf16.mxu0 0
        %2269 = vmatpush1.bf16.msra.mxu0 0
        %2270 = vmatprep.subr.bf16.mxu0 0
        %2271 = vmatpush1.bf16.msra.mxu0 0
        %2272 = vmatprep.subr.bf16.mxu0 0
        %2273 = vmatpush1.bf16.msra.mxu0 0
        %2274 = vmatprep.subr.bf16.mxu0 0
        %2275 = vmatpush1.bf16.msra.mxu0 0
        %2276 = vmatprep.mubr.bf16.mxu0 0
        %2277 = vmatmul.mubr.bf16.gmra.mrb[0].mxu0 %v2242
        %v2278 = vpop.f32.mrb[0].mxu0
        %v2279 = vadd.f32 0.0, %v2278
        %v2280 = vpop.f32.mrb[0].mxu0
        %v2281 = vpop.f32.mrb[0].mxu0
        %v2282 = vpop.f32.mrb[0].mxu0
        %2283 = vdwg.mxu0
        %v2284 = vadd.f32 %v2197, %v2279
        %s2285 = scalar_lea.vmem %s5, 120
        %v2286 = vld [vmem:[%s2285] sm:$0xf]
        %v2287 = vld [vmem:[%s2285 + $0x4] sm:$0xf]
        %v2288 = vld [vmem:[%s2285 + $0x8] sm:$0xf]
        %v2289 = vld [vmem:[%s2285 + $0xc] sm:$0xf]
        %v2290 = vld [vmem:[%s2285 + $0x10] sm:$0xf]
        %v2291 = vld [vmem:[%s2285 + $0x14] sm:$0xf]
        %v2292 = vld [vmem:[%s2285 + $0x18] sm:$0xf]
        %v2293 = vld [vmem:[%s2285 + $0x1c] sm:$0xf]
        %v2294 = vld [vmem:[%s2285 + $0x20] sm:$0xf]
        %v2295 = vld [vmem:[%s2285 + $0x24] sm:$0xf]
        %v2296 = vrot.slane %v2122, 1
        %v2307 = vunpack.c.l.b16 %v2286
        %v2308 = vunpack.c.l.b16 %v2287
        %v2309 = vunpack.c.l.b16 %v2288
        %v2310 = vunpack.c.l.b16 %v2289
        %v2311 = vunpack.c.l.b16 %v2290
        %v2312 = vunpack.c.l.b16 %v2291
        %v2313 = vunpack.c.l.b16 %v2292
        %v2314 = vunpack.c.l.b16 %v2293
        %v2315 = vunpack.c.l.b16 %v2294
        %v2316 = vunpack.c.l.b16 %v2295
        %v2317 = vpack.c.b16 %v2308, %v2307
        %v2318 = vpack.c.b16 %v2310, %v2309
        %v2319 = vpack.c.b16 %v2312, %v2311
        %v2320 = vpack.c.b16 %v2314, %v2313
        %v2321 = vpack.c.b16 %v2316, %v2315
        %v2328 = vsel %vm2066, %v2296, 0
        %2330 = vmatprep.subr.bf16.mxu0 0
        %2331 = vmatpush1.bf16.msra.mxu0 %v2317
        %2332 = vmatprep.subr.bf16.mxu0 0
        %2333 = vmatpush1.bf16.msra.mxu0 %v2318
        %2334 = vmatprep.subr.bf16.mxu0 0
        %2335 = vmatpush1.bf16.msra.mxu0 %v2319
        %2336 = vmatprep.subr.bf16.mxu0 0
        %2337 = vmatpush1.bf16.msra.mxu0 %v2320
        %2338 = vmatprep.subr.bf16.mxu0 0
        %2339 = vmatpush1.bf16.msra.mxu0 %v2321
        %2340 = vmatprep.subr.bf16.mxu0 0
        %2341 = vmatpush1.bf16.msra.mxu0 0
        %2342 = vmatprep.subr.bf16.mxu0 0
        %2343 = vmatpush1.bf16.msra.mxu0 0
        %2344 = vmatprep.subr.bf16.mxu0 0
        %2345 = vmatpush1.bf16.msra.mxu0 0
        %2346 = vmatprep.subr.bf16.mxu0 0
        %2347 = vmatpush1.bf16.msra.mxu0 0
        %2348 = vmatprep.subr.bf16.mxu0 0
        %2349 = vmatpush1.bf16.msra.mxu0 0
        %2350 = vmatprep.subr.bf16.mxu0 0
        %2351 = vmatpush1.bf16.msra.mxu0 0
        %2352 = vmatprep.subr.bf16.mxu0 0
        %2353 = vmatpush1.bf16.msra.mxu0 0
        %2354 = vmatprep.subr.bf16.mxu0 0
        %2355 = vmatpush1.bf16.msra.mxu0 0
        %2356 = vmatprep.subr.bf16.mxu0 0
        %2357 = vmatpush1.bf16.msra.mxu0 0
        %2358 = vmatprep.subr.bf16.mxu0 0
        %2359 = vmatpush1.bf16.msra.mxu0 0
        %2360 = vmatprep.subr.bf16.mxu0 0
        %2361 = vmatpush1.bf16.msra.mxu0 0
        %2362 = vmatprep.mubr.bf16.mxu0 0
        %2363 = vmatmul.mubr.bf16.gmra.mrb[0].mxu0 %v2328
        %v2364 = vpop.f32.mrb[0].mxu0
        %v2365 = vadd.f32 0.0, %v2364
        %v2366 = vpop.f32.mrb[0].mxu0
        %v2367 = vpop.f32.mrb[0].mxu0
        %v2368 = vpop.f32.mrb[0].mxu0
        %2369 = vdwg.mxu0
        %v2370 = vadd.f32 %v2284, %v2365
        %s2371 = scalar_lea.vmem %s5, 160
        %v2372 = vld [vmem:[%s2371] sm:$0xf]
        %v2373 = vld [vmem:[%s2371 + $0x4] sm:$0xf]
        %v2374 = vld [vmem:[%s2371 + $0x8] sm:$0xf]
        %v2375 = vld [vmem:[%s2371 + $0xc] sm:$0xf]
        %v2376 = vld [vmem:[%s2371 + $0x10] sm:$0xf]
        %v2377 = vld [vmem:[%s2371 + $0x14] sm:$0xf]
        %v2378 = vld [vmem:[%s2371 + $0x18] sm:$0xf]
        %v2379 = vld [vmem:[%s2371 + $0x1c] sm:$0xf]
        %v2380 = vld [vmem:[%s2371 + $0x20] sm:$0xf]
        %v2381 = vld [vmem:[%s2371 + $0x24] sm:$0xf]
        %v2382 = vrot.slane %v2024, 2
        %v2393 = vunpack.c.l.b16 %v2372
        %v2394 = vunpack.c.l.b16 %v2373
        %v2395 = vunpack.c.l.b16 %v2374
        %v2396 = vunpack.c.l.b16 %v2375
        %v2397 = vunpack.c.l.b16 %v2376
        %v2398 = vunpack.c.l.b16 %v2377
        %v2399 = vunpack.c.l.b16 %v2378
        %v2400 = vunpack.c.l.b16 %v2379
        %v2401 = vunpack.c.l.b16 %v2380
        %v2402 = vunpack.c.l.b16 %v2381
        %v2403 = vpack.c.b16 %v2394, %v2393
        %v2404 = vpack.c.b16 %v2396, %v2395
        %v2405 = vpack.c.b16 %v2398, %v2397
        %v2406 = vpack.c.b16 %v2400, %v2399
        %v2407 = vpack.c.b16 %v2402, %v2401
        %v2414 = vsel %vm2066, %v2382, 0
        %2416 = vmatprep.subr.bf16.mxu0 0
        %2417 = vmatpush1.bf16.msra.mxu0 %v2403
        %2418 = vmatprep.subr.bf16.mxu0 0
        %2419 = vmatpush1.bf16.msra.mxu0 %v2404
        %2420 = vmatprep.subr.bf16.mxu0 0
        %2421 = vmatpush1.bf16.msra.mxu0 %v2405
        %2422 = vmatprep.subr.bf16.mxu0 0
        %2423 = vmatpush1.bf16.msra.mxu0 %v2406
        %2424 = vmatprep.subr.bf16.mxu0 0
        %2425 = vmatpush1.bf16.msra.mxu0 %v2407
        %2426 = vmatprep.subr.bf16.mxu0 0
        %2427 = vmatpush1.bf16.msra.mxu0 0
        %2428 = vmatprep.subr.bf16.mxu0 0
        %2429 = vmatpush1.bf16.msra.mxu0 0
        %2430 = vmatprep.subr.bf16.mxu0 0
        %2431 = vmatpush1.bf16.msra.mxu0 0
        %2432 = vmatprep.subr.bf16.mxu0 0
        %2433 = vmatpush1.bf16.msra.mxu0 0
        %2434 = vmatprep.subr.bf16.mxu0 0
        %2435 = vmatpush1.bf16.msra.mxu0 0
        %2436 = vmatprep.subr.bf16.mxu0 0
        %2437 = vmatpush1.bf16.msra.mxu0 0
        %2438 = vmatprep.subr.bf16.mxu0 0
        %2439 = vmatpush1.bf16.msra.mxu0 0
        %2440 = vmatprep.subr.bf16.mxu0 0
        %2441 = vmatpush1.bf16.msra.mxu0 0
        %2442 = vmatprep.subr.bf16.mxu0 0
        %2443 = vmatpush1.bf16.msra.mxu0 0
        %2444 = vmatprep.subr.bf16.mxu0 0
        %2445 = vmatpush1.bf16.msra.mxu0 0
        %2446 = vmatprep.subr.bf16.mxu0 0
        %2447 = vmatpush1.bf16.msra.mxu0 0
        %2448 = vmatprep.mubr.bf16.mxu0 0
        %2449 = vmatmul.mubr.bf16.gmra.mrb[0].mxu0 %v2414
        %v2450 = vpop.f32.mrb[0].mxu0
        %v2451 = vadd.f32 0.0, %v2450
        %v2452 = vpop.f32.mrb[0].mxu0
        %v2453 = vpop.f32.mrb[0].mxu0
        %v2454 = vpop.f32.mrb[0].mxu0
        %2455 = vdwg.mxu0
        %v2456 = vadd.f32 %v2370, %v2451
        %v2457 = vmax.f32 %v2456, 0.0
        %v2458 = vpack.c.bf16 %v2457, %v2457
        %v2459 = vld [vmem:[%s7] sm:$0xf]
        %v2460 = vld [vmem:[%s7 + $0x4] sm:$0xf]
        %v2461 = vld [vmem:[%s7 + $0x8] sm:$0xf]
        %v2462 = vld [vmem:[%s7 + $0xc] sm:$0xf]
        %v2463 = vld [vmem:[%s7 + $0x10] sm:$0xf]
        %v2464 = vld [vmem:[%s7 + $0x14] sm:$0xf]
        %v2465 = vld [vmem:[%s7 + $0x18] sm:$0xf]
        %v2466 = vld [vmem:[%s7 + $0x1c] sm:$0xf]
        %v2467 = vld [vmem:[%s7 + $0x20] sm:$0xf]
        %v2468 = vld [vmem:[%s7 + $0x24] sm:$0xf]
        %v2469 = vld [vmem:[%s7 + $0x28] sm:$0xf]
        %v2470 = vld [vmem:[%s7 + $0x2c] sm:$0xf]
        %v2471 = vld [vmem:[%s7 + $0x30] sm:$0xf]
        %v2472 = vld [vmem:[%s7 + $0x34] sm:$0xf]
        %v2473 = vld [vmem:[%s7 + $0x38] sm:$0xf]
        %v2474 = vld [vmem:[%s8] sm:$0x1]
        %v2490 = vunpack.c.l.b16 %v2459
        %v2491 = vunpack.c.l.b16 %v2460
        %v2492 = vunpack.c.l.b16 %v2461
        %v2493 = vunpack.c.l.b16 %v2462
        %v2494 = vunpack.c.l.b16 %v2463
        %v2495 = vunpack.c.l.b16 %v2464
        %v2496 = vunpack.c.l.b16 %v2465
        %v2497 = vunpack.c.l.b16 %v2466
        %v2498 = vunpack.c.l.b16 %v2467
        %v2499 = vunpack.c.l.b16 %v2468
        %v2500 = vunpack.c.l.b16 %v2469
        %v2501 = vunpack.c.l.b16 %v2470
        %v2502 = vunpack.c.l.b16 %v2471
        %v2503 = vunpack.c.l.b16 %v2472
        %v2504 = vunpack.c.l.b16 %v2473
        %v2505 = vpack.c.b16 %v2491, %v2490
        %v2506 = vpack.c.b16 %v2493, %v2492
        %v2507 = vpack.c.b16 %v2495, %v2494
        %v2508 = vpack.c.b16 %v2497, %v2496
        %v2509 = vpack.c.b16 %v2499, %v2498
        %v2510 = vpack.c.b16 %v2501, %v2500
        %v2511 = vpack.c.b16 %v2503, %v2502
        %v2512 = vpack.c.b16 %v2504, %v2504
        %vm2520 = vcmask 982016
        %v2522 = vsel %vm2520, %v2458, 0
        %vm2524 = vcmask 1043456
        %v2526 = vsel %vm2524, %v2512, 0
        %2528 = vmatprep.subr.bf16.mxu0 0
        %2529 = vmatpush1.bf16.msra.mxu0 %v2505
        %2530 = vmatprep.subr.bf16.mxu0 0
        %2531 = vmatpush1.bf16.msra.mxu0 %v2506
        %2532 = vmatprep.subr.bf16.mxu0 0
        %2533 = vmatpush1.bf16.msra.mxu0 %v2507
        %2534 = vmatprep.subr.bf16.mxu0 0
        %2535 = vmatpush1.bf16.msra.mxu0 %v2508
        %2536 = vmatprep.subr.bf16.mxu0 0
        %2537 = vmatpush1.bf16.msra.mxu0 %v2509
        %2538 = vmatprep.subr.bf16.mxu0 0
        %2539 = vmatpush1.bf16.msra.mxu0 %v2510
        %2540 = vmatprep.subr.bf16.mxu0 0
        %2541 = vmatpush1.bf16.msra.mxu0 %v2511
        %2542 = vmatprep.subr.bf16.mxu0 0
        %2543 = vmatpush1.bf16.msra.mxu0 %v2526
        %2544 = vmatprep.subr.bf16.mxu0 0
        %2545 = vmatpush1.bf16.msra.mxu0 0
        %2546 = vmatprep.subr.bf16.mxu0 0
        %2547 = vmatpush1.bf16.msra.mxu0 0
        %2548 = vmatprep.subr.bf16.mxu0 0
        %2549 = vmatpush1.bf16.msra.mxu0 0
        %2550 = vmatprep.subr.bf16.mxu0 0
        %2551 = vmatpush1.bf16.msra.mxu0 0
        %2552 = vmatprep.subr.bf16.mxu0 0
        %2553 = vmatpush1.bf16.msra.mxu0 0
        %2554 = vmatprep.subr.bf16.mxu0 0
        %2555 = vmatpush1.bf16.msra.mxu0 0
        %2556 = vmatprep.subr.bf16.mxu0 0
        %2557 = vmatpush1.bf16.msra.mxu0 0
        %2558 = vmatprep.subr.bf16.mxu0 0
        %2559 = vmatpush1.bf16.msra.mxu0 0
        %2560 = vmatprep.mubr.bf16.mxu0 0
        %2561 = vmatmul.mubr.bf16.gmra.mrb[0].mxu0 %v2522
        %v2562 = vpop.f32.mrb[0].mxu0
        %v2563 = vadd.f32 %v2474, %v2562
        %v2564 = vpop.f32.mrb[0].mxu0
        %v2565 = vpop.f32.mrb[0].mxu0
        %v2566 = vpop.f32.mrb[0].mxu0
        %2567 = vdwg.mxu0
        %v2568 = vmax.f32 %v2563, 0.0
        %v2569 = vpack.c.bf16 %v2568, %v2568
        %v2570 = vld [vmem:[%s9] sm:$0xf]
        %v2571 = vld [vmem:[%s9 + $0x4] sm:$0xf]
        %v2572 = vld [vmem:[%s9 + $0x8] sm:$0xf]
        %v2573 = vld [vmem:[%s9 + $0xc] sm:$0xf]
        %v2574 = vld [vmem:[%s9 + $0x10] sm:$0xf]
        %v2575 = vld [vmem:[%s9 + $0x14] sm:$0xf]
        %v2576 = vld [vmem:[%s9 + $0x18] sm:$0xf]
        %v2577 = vld [vmem:[%s9 + $0x1c] sm:$0xf]
        %v2578 = vld [vmem:[%s9 + $0x20] sm:$0xf]
        %v2579 = vld [vmem:[%s9 + $0x24] sm:$0xf]
        %v2580 = vld [vmem:[%s9 + $0x28] sm:$0x3]
        %v2581 = vld [vmem:[%s10] sm:$0x1]
        %v2593 = vunpack.c.l.b16 %v2570
        %v2594 = vunpack.c.l.b16 %v2571
        %v2595 = vunpack.c.l.b16 %v2572
        %v2596 = vunpack.c.l.b16 %v2573
        %v2597 = vunpack.c.l.b16 %v2574
        %v2598 = vunpack.c.l.b16 %v2575
        %v2599 = vunpack.c.l.b16 %v2576
        %v2600 = vunpack.c.l.b16 %v2577
        %v2601 = vunpack.c.l.b16 %v2578
        %v2602 = vunpack.c.l.b16 %v2579
        %v2603 = vunpack.c.l.b16 %v2580
        %v2604 = vpack.c.b16 %v2594, %v2593
        %v2605 = vpack.c.b16 %v2596, %v2595
        %v2606 = vpack.c.b16 %v2598, %v2597
        %v2607 = vpack.c.b16 %v2600, %v2599
        %v2608 = vpack.c.b16 %v2602, %v2601
        %v2609 = vpack.c.b16 %v2603, %v2603
        %v2616 = vsel %vm1229, %v2569, 0
        %v2619 = vsel %vm1233, %v2609, 0
        %2621 = vmatprep.subr.bf16.mxu0 0
        %2622 = vmatpush1.bf16.msra.mxu0 %v2604
        %2623 = vmatprep.subr.bf16.mxu0 0
        %2624 = vmatpush1.bf16.msra.mxu0 %v2605
        %2625 = vmatprep.subr.bf16.mxu0 0
        %2626 = vmatpush1.bf16.msra.mxu0 %v2606
        %2627 = vmatprep.subr.bf16.mxu0 0
        %2628 = vmatpush1.bf16.msra.mxu0 %v2607
        %2629 = vmatprep.subr.bf16.mxu0 0
        %2630 = vmatpush1.bf16.msra.mxu0 %v2608
        %2631 = vmatprep.subr.bf16.mxu0 0
        %2632 = vmatpush1.bf16.msra.mxu0 %v2619
        %2633 = vmatprep.subr.bf16.mxu0 0
        %2634 = vmatpush1.bf16.msra.mxu0 0
        %2635 = vmatprep.subr.bf16.mxu0 0
        %2636 = vmatpush1.bf16.msra.mxu0 0
        %2637 = vmatprep.subr.bf16.mxu0 0
        %2638 = vmatpush1.bf16.msra.mxu0 0
        %2639 = vmatprep.subr.bf16.mxu0 0
        %2640 = vmatpush1.bf16.msra.mxu0 0
        %2641 = vmatprep.subr.bf16.mxu0 0
        %2642 = vmatpush1.bf16.msra.mxu0 0
        %2643 = vmatprep.subr.bf16.mxu0 0
        %2644 = vmatpush1.bf16.msra.mxu0 0
        %2645 = vmatprep.subr.bf16.mxu0 0
        %2646 = vmatpush1.bf16.msra.mxu0 0
        %2647 = vmatprep.subr.bf16.mxu0 0
        %2648 = vmatpush1.bf16.msra.mxu0 0
        %2649 = vmatprep.subr.bf16.mxu0 0
        %2650 = vmatpush1.bf16.msra.mxu0 0
        %2651 = vmatprep.subr.bf16.mxu0 0
        %2652 = vmatpush1.bf16.msra.mxu0 0
        %2653 = vmatprep.mubr.bf16.mxu0 0
        %2654 = vmatmul.mubr.bf16.gmra.mrb[0].mxu0 %v2616
        %v2655 = vpop.f32.mrb[0].mxu0
        %v2656 = vadd.f32 %v2581, %v2655
        %v2657 = vpop.f32.mrb[0].mxu0
        %v2658 = vpop.f32.mrb[0].mxu0
        %v2659 = vpop.f32.mrb[0].mxu0
        %2660 = vdwg.mxu0
        %vm2661 = vcmask 81920
        %2662 = vst.msk [vmem:[%s378] sm:$0x1] %vm2661, %v2656
        %s2663 = sand.u32 %s269, 1
        %s2664 = scalar_lea.sflag [#allocation3], %s2663
        %s2665 = sand.u32 %s269, 1
        %s2666 = scalar_lea.vmem [#allocation2], %s2665
        // Predicated region
        $region65: #{cnn_forward.1} parent=63 // pred_check
          %p2667 = pneg %p279
        $region66: #{cnn_forward.1} parent=63 // pred_check_branch
          %2669 = sbr.rel (%p2667) target = $region68
        $region67: #{cnn_forward.1} parent=63 // pred_region
          %s2671 = ssub.s32 16, 16
          %2672 = vsyncadd %s2664, %s2671
          %s2673 = smul.addr %s25, 16
          %s2674 = scalar_lea.hbm %s11, %s2673
          %s2676 = sshll.u32 %s2666, 4
          %s2677 = int_to_ptr.vmem [resolvable:$true] %s2676
          %2679 = dma.vmem_to_hbm [thread:$0]  %s2677, 16, %s2674, %s2664
        $region68: #{cnn_forward.1} parent=63 // pred_fallthru
          _
      $region64: #{cnn_forward.1} parent=5 // pred_fallthru
        _
      %p2680 = scmp.le.s32.totalorder 2, %s20
      // Predicated region
      $region69: #{cnn_forward.1} parent=5 // pred_check
        %p2681 = pneg %p2680
      $region70: #{cnn_forward.1} parent=5 // pred_check_branch
        %2683 = sbr.rel (%p2681) target = $region72
      $region71: #{cnn_forward.1} parent=5 // pred_region
        %s2684 = ssub.s32 %s20, 2
        // Predicated region
        $region73: #{cnn_forward.1} parent=71 // pred_check
          %p2685 = pneg %p285
        $region74: #{cnn_forward.1} parent=71 // pred_check_branch
          %2687 = sbr.rel (%p2685) target = $region76
        $region75: #{cnn_forward.1} parent=71 // pred_region
          %s2688 = sand.u32 %s270, 1
          %s2689 = scalar_lea.sflag [#allocation3], %s2688
          %s2690 = sand.u32 %s270, 1
          %s2691 = scalar_lea.vmem [#allocation2], %s2690
          %2692 = dma.done %s2689, 16
        $region76: #{cnn_forward.1} parent=71 // pred_fallthru
          _
      $region72: #{cnn_forward.1} parent=5 // pred_fallthru
        _
    $region6: #{cnn_forward.1} parent=1 // loop_footer
      %s24 = sadd.s32 1, %s20
    $region7: #{cnn_forward.1} parent=1 // loop_footer_branch
      %19 = sbr.rel target = $region3
    $region8: #{cnn_forward.1} parent=1 // loop_exit
      _
    %2693 = vsyncpa [#allocation3], 1
    %s2694 = scalar_lea.sflag [#allocation3], 1
    %2695 = vsyncpa %s2694, 1

</llo_original>
